<compile_context>
chip_gen: v7x
topology: tpu7x:2x2x1
jax: 0.10.0
libtpu: 0.0.40
codegen_flags: <defaults>
</compile_context>

<pallas_src>
import functools
import math

import jax
import jax.numpy as jnp
from jax.experimental import pallas as pl
from jax.experimental.pallas import tpu as pltpu


def _gelu_tanh(x):
    # TODO(synk): nn.GELU() default is the exact erf GELU; the tanh approximation
    # is used for guaranteed Mosaic lowering (max abs deviation ~1e-3).
    c = math.sqrt(2.0 / math.pi)
    return 0.5 * x * (1.0 + jnp.tanh(c * (x + 0.044715 * x * x * x)))


# --------------------------------- kernel -----------------------------------
def _transformer_block_kernel(
    x_ref, ln1_g, ln1_b, wq, bq, wk, bk, wv, bv, wo,
    ln2_g, ln2_b, w1, b1, w2, b2, o_ref,
    *, num_heads, key_dim, eps,
):
    x = x_ref[0].astype(jnp.float32)                        # (S, E)

    # ---- dropout1 (identity, eval) + LayerNorm 1 ----
    mu = jnp.mean(x, axis=-1, keepdims=True)
    var = jnp.mean(jnp.square(x - mu), axis=-1, keepdims=True)
    xn = (x - mu) * jax.lax.rsqrt(var + eps)
    xn = xn * ln1_g[...] + ln1_b[...]

    # ---- multi-head self-attention (all heads' QKV in one wide matmul each) ----
    q = jnp.dot(xn, wq[...], preferred_element_type=jnp.float32) + bq[...]
    k = jnp.dot(xn, wk[...], preferred_element_type=jnp.float32) + bk[...]
    v = jnp.dot(xn, wv[...], preferred_element_type=jnp.float32) + bv[...]
    wo_all = wo[...]

    inv_scale = 1.0 / math.sqrt(key_dim)
    msa = jnp.zeros(x.shape, jnp.float32)
    for h in range(num_heads):                              # static unroll
        lo, hi = h * key_dim, (h + 1) * key_dim
        qh, kh, vh = q[:, lo:hi], k[:, lo:hi], v[:, lo:hi]
        s = jax.lax.dot_general(qh, kh, (((1,), (1,)), ((), ())),
                                preferred_element_type=jnp.float32) * inv_scale
        # NB: the PyTorch module applies F.softmax(..., dim=1) on the (B,Sq,Sk)
        # scores, i.e. normalizes over the QUERY axis; per batch element that
        # is axis 0 of the (Sq, Sk) tile.  Quirk preserved verbatim.
        s = s - jnp.max(s, axis=0, keepdims=True)
        p = jnp.exp(s)
        p = p / jnp.sum(p, axis=0, keepdims=True)
        zh = jnp.dot(p, vh, preferred_element_type=jnp.float32)
        # Fold the output projection: Z @ W == sum_h z_h @ W[h*kd:(h+1)*kd, :]
        msa = msa + jnp.dot(zh, wo_all[lo:hi, :], preferred_element_type=jnp.float32)

    # ---- dropout2 (identity) + residual ----
    add = x + msa

    # ---- LayerNorm 2 ----
    mu2 = jnp.mean(add, axis=-1, keepdims=True)
    var2 = jnp.mean(jnp.square(add - mu2), axis=-1, keepdims=True)
    xn2 = (add - mu2) * jax.lax.rsqrt(var2 + eps)
    xn2 = xn2 * ln2_g[...] + ln2_b[...]

    # ---- MLP ----
    h1 = jnp.dot(xn2, w1[...], preferred_element_type=jnp.float32) + b1[...]
    h1 = _gelu_tanh(h1)
    mlp = jnp.dot(h1, w2[...], preferred_element_type=jnp.float32) + b2[...]

    # ---- dropout3 (identity) + residual: one dense full-tile store ----
    o_ref[0] = (add + mlp).astype(o_ref.dtype)


# --------------------------------- wrapper ----------------------------------
_PARAM_ORDER = ("ln1_g", "ln1_b", "wq", "bq", "wk", "bk", "wv", "bv", "wo",
                "ln2_g", "ln2_b", "w1", "b1", "w2", "b2")


def transformer_block(x, params, *, num_heads, eps=1e-5):
    b, s, e = x.shape
    assert e % num_heads == 0
    key_dim = e // num_heads
    hidden = params["w1"].shape[1]

    kernel = functools.partial(
        _transformer_block_kernel, num_heads=num_heads, key_dim=key_dim, eps=eps
    )

    def _full(shape):
        nd = len(shape)
        return pl.BlockSpec(shape, lambda bb: (0,) * nd)

    weight_args = [params[name] for name in _PARAM_ORDER]
    in_specs = [pl.BlockSpec((1, s, e), lambda bb: (bb, 0, 0))]
    in_specs += [_full(params[name].shape) for name in _PARAM_ORDER]

    # Advisory cost estimate for XLA scheduling around this custom call.
    flops_per_b = (
        3 * 2 * s * e * e                        # q/k/v projections
        + num_heads * (2 * 2 * s * s * key_dim)  # scores + weighted values
        + 2 * s * e * e                          # output projection
        + 2 * 2 * s * e * hidden                 # MLP
    )
    transc_per_b = num_heads * s * s + s * hidden  # exp (softmax) + tanh (gelu)
    param_bytes = sum(int(v.size) * v.dtype.itemsize for v in weight_args)
    bytes_accessed = 2 * int(x.size) * x.dtype.itemsize + param_bytes

    return pl.pallas_call(
        kernel,
        out_shape=jax.ShapeDtypeStruct((b, s, e), x.dtype),
        grid_spec=pltpu.PrefetchScalarGridSpec(
            num_scalar_prefetch=0,
            grid=(b,),
            in_specs=in_specs,
            out_specs=pl.BlockSpec((1, s, e), lambda bb: (bb, 0, 0)),
        ),
        compiler_params=pltpu.CompilerParams(
            dimension_semantics=("parallel",),
        ),
        cost_estimate=pl.CostEstimate(
            flops=int(b * flops_per_b),
            transcendentals=int(b * transc_per_b),
            bytes_accessed=int(bytes_accessed),
        ),
    )(x, *weight_args)


# -------------------------------- reference ----------------------------------
_HIGH = jax.lax.Precision.HIGHEST


def _reference(x, p, *, num_heads, eps=1e-5):
    e = x.shape[-1]
    kd = e // num_heads

    def ln(v, g, b):
        mu = v.mean(-1, keepdims=True)
        var = ((v - mu) ** 2).mean(-1, keepdims=True)
        return (v - mu) * jax.lax.rsqrt(var + eps) * g + b

    def dense(v, w, bb):
        return jnp.einsum("bse,ef->bsf", v, w, precision=_HIGH) + bb

    xn = ln(x, p["ln1_g"], p["ln1_b"])                       # dropout1 = identity
    q = dense(xn, p["wq"], p["bq"])
    k = dense(xn, p["wk"], p["bk"])
    v = dense(xn, p["wv"], p["bv"])
    zs = []
    for h in range(num_heads):
        sl = slice(h * kd, (h + 1) * kd)
        s = jnp.einsum("bqd,bkd->bqk", q[..., sl], k[..., sl],
                       precision=_HIGH) / math.sqrt(kd)
        a = jax.nn.softmax(s, axis=1)                        # torch dim=1 quirk
        zs.append(jnp.einsum("bqk,bkd->bqd", a, v[..., sl], precision=_HIGH))
    z = jnp.concatenate(zs, axis=-1)
    add = x + jnp.einsum("bse,ef->bsf", z, p["wo"], precision=_HIGH)
    xn2 = ln(add, p["ln2_g"], p["ln2_b"])
    h1 = _gelu_tanh(jnp.einsum("bse,eh->bsh", xn2, p["w1"], precision=_HIGH) + p["b1"])
    return add + jnp.einsum("bsh,he->bse", h1, p["w2"], precision=_HIGH) + p["b2"]


def _init_params(key, emb_dim, num_heads, hidden_dim, dtype=jnp.float32):
    ks = jax.random.split(key, 15)
    e, hd = emb_dim, hidden_dim

    def n(k, shape, s=0.1):
        return jax.random.normal(k, shape, dtype) * s

    return {
        "ln1_g": 1.0 + n(ks[0], (1, e), 0.05),
        "ln1_b": n(ks[1], (1, e), 0.05),
        "wq": n(ks[2], (e, e)), "bq": n(ks[3], (1, e), 0.05),
        "wk": n(ks[4], (e, e)), "bk": n(ks[5], (1, e), 0.05),
        "wv": n(ks[6], (e, e)), "bv": n(ks[7], (1, e), 0.05),
        "wo": n(ks[8], (e, e)),
        "ln2_g": 1.0 + n(ks[9], (1, e), 0.05),
        "ln2_b": n(ks[10], (1, e), 0.05),
        "w1": n(ks[11], (e, hd)), "b1": n(ks[12], (1, hd), 0.05),
        "w2": n(ks[13], (hd, e)), "b2": n(ks[14], (1, e), 0.05),
    }


# ----------------------------------- main ------------------------------------
if __name__ == "__main__":
    key = jax.random.PRNGKey(0)
    k_x, k_p = jax.random.split(key)
    batch, seq, emb_dim, num_heads, hidden_dim = 2, 8, 32, 4, 64

    x = jax.random.normal(k_x, (batch, seq, emb_dim), dtype=jnp.float32)
    params = _init_params(k_p, emb_dim, num_heads, hidden_dim)

    fn = jax.jit(functools.partial(transformer_block, num_heads=num_heads))
    out = jax.block_until_ready(fn(x, params))

    ref = _reference(x, params, num_heads=num_heads)
    assert out.shape == (batch, seq, emb_dim), out.shape
    err = float(jnp.max(jnp.abs(out - ref)))
    assert jnp.allclose(out, ref, atol=1e-3, rtol=1e-3), f"max abs err {err}"

    print("KERNEL_OK")
</pallas_src>

<mosaic_0001>
module attributes {stable_mosaic.version = 11 : i64} {
  func.func @_transformer_block_kernel(%arg0: i32, %arg1: memref<1x8x32xf32, #tpu.memory_space<vmem>>, %arg2: memref<1x32xf32, #tpu.memory_space<vmem>>, %arg3: memref<1x32xf32, #tpu.memory_space<vmem>>, %arg4: memref<32x32xf32, #tpu.memory_space<vmem>>, %arg5: memref<1x32xf32, #tpu.memory_space<vmem>>, %arg6: memref<32x32xf32, #tpu.memory_space<vmem>>, %arg7: memref<1x32xf32, #tpu.memory_space<vmem>>, %arg8: memref<32x32xf32, #tpu.memory_space<vmem>>, %arg9: memref<1x32xf32, #tpu.memory_space<vmem>>, %arg10: memref<32x32xf32, #tpu.memory_space<vmem>>, %arg11: memref<1x32xf32, #tpu.memory_space<vmem>>, %arg12: memref<1x32xf32, #tpu.memory_space<vmem>>, %arg13: memref<32x64xf32, #tpu.memory_space<vmem>>, %arg14: memref<1x64xf32, #tpu.memory_space<vmem>>, %arg15: memref<64x32xf32, #tpu.memory_space<vmem>>, %arg16: memref<1x32xf32, #tpu.memory_space<vmem>>, %arg17: memref<1x8x32xf32, #tpu.memory_space<vmem>>) attributes {dimension_semantics = [#tpu.dimension_semantics<parallel>], iteration_bounds = array<i64: 2>, scalar_prefetch = 0 : i64, scratch_operands = 0 : i64, tpu.core_type = #tpu.core_type<tc>, window_params = [{transform_indices = @transform_0, window_bounds = array<i64: 1, 8, 32>}, {pipeline_mode = #tpu.pipeline_mode<synchronous>, transform_indices = @transform_1, window_bounds = array<i64: 1, 32>}, {pipeline_mode = #tpu.pipeline_mode<synchronous>, transform_indices = @transform_2, window_bounds = array<i64: 1, 32>}, {pipeline_mode = #tpu.pipeline_mode<synchronous>, transform_indices = @transform_3, window_bounds = array<i64: 32, 32>}, {pipeline_mode = #tpu.pipeline_mode<synchronous>, transform_indices = @transform_4, window_bounds = array<i64: 1, 32>}, {pipeline_mode = #tpu.pipeline_mode<synchronous>, transform_indices = @transform_5, window_bounds = array<i64: 32, 32>}, {pipeline_mode = #tpu.pipeline_mode<synchronous>, transform_indices = @transform_6, window_bounds = array<i64: 1, 32>}, {pipeline_mode = #tpu.pipeline_mode<synchronous>, transform_indices = @transform_7, window_bounds = array<i64: 32, 32>}, {pipeline_mode = #tpu.pipeline_mode<synchronous>, transform_indices = @transform_8, window_bounds = array<i64: 1, 32>}, {pipeline_mode = #tpu.pipeline_mode<synchronous>, transform_indices = @transform_9, window_bounds = array<i64: 32, 32>}, {pipeline_mode = #tpu.pipeline_mode<synchronous>, transform_indices = @transform_10, window_bounds = array<i64: 1, 32>}, {pipeline_mode = #tpu.pipeline_mode<synchronous>, transform_indices = @transform_11, window_bounds = array<i64: 1, 32>}, {pipeline_mode = #tpu.pipeline_mode<synchronous>, transform_indices = @transform_12, window_bounds = array<i64: 32, 64>}, {pipeline_mode = #tpu.pipeline_mode<synchronous>, transform_indices = @transform_13, window_bounds = array<i64: 1, 64>}, {pipeline_mode = #tpu.pipeline_mode<synchronous>, transform_indices = @transform_14, window_bounds = array<i64: 64, 32>}, {pipeline_mode = #tpu.pipeline_mode<synchronous>, transform_indices = @transform_15, window_bounds = array<i64: 1, 32>}, {transform_indices = @transform_16, window_bounds = array<i64: 1, 8, 32>}]} {
    %c0 = arith.constant 0 : index
    %c0_0 = arith.constant 0 : index
    %c0_1 = arith.constant 0 : index
    %0 = vector.load %arg1[%c0, %c0_0, %c0_1] : memref<1x8x32xf32, #tpu.memory_space<vmem>>, vector<1x8x32xf32>
    %1 = vector.shape_cast %0 : vector<1x8x32xf32> to vector<8x32xf32>
    %cst = arith.constant dense<0.000000e+00> : vector<8xf32>
    %2 = vector.multi_reduction <add>, %1, %cst [1] : vector<8x32xf32> to vector<8xf32>
    %3 = vector.shape_cast %2 : vector<8xf32> to vector<8x1xf32>
    %cst_2 = arith.constant 3.200000e+01 : f32
    %4 = vector.broadcast %cst_2 : f32 to vector<8x1xf32>
    %5 = arith.divf %3, %4 : vector<8x1xf32>
    %6 = vector.broadcast %5 : vector<8x1xf32> to vector<8x32xf32>
    %7 = arith.subf %1, %6 : vector<8x32xf32>
    %8 = arith.mulf %7, %7 : vector<8x32xf32>
    %cst_3 = arith.constant dense<0.000000e+00> : vector<8xf32>
    %9 = vector.multi_reduction <add>, %8, %cst_3 [1] : vector<8x32xf32> to vector<8xf32>
    %10 = vector.shape_cast %9 : vector<8xf32> to vector<8x1xf32>
    %cst_4 = arith.constant 3.200000e+01 : f32
    %11 = vector.broadcast %cst_4 : f32 to vector<8x1xf32>
    %12 = arith.divf %10, %11 : vector<8x1xf32>
    %13 = vector.broadcast %5 : vector<8x1xf32> to vector<8x32xf32>
    %14 = arith.subf %1, %13 : vector<8x32xf32>
    %cst_5 = arith.constant 9.99999974E-6 : f32
    %15 = vector.broadcast %cst_5 : f32 to vector<8x1xf32>
    %16 = arith.addf %12, %15 : vector<8x1xf32>
    %17 = math.rsqrt %16 : vector<8x1xf32>
    %18 = vector.broadcast %17 : vector<8x1xf32> to vector<8x32xf32>
    %19 = arith.mulf %14, %18 : vector<8x32xf32>
    %c0_6 = arith.constant 0 : index
    %c0_7 = arith.constant 0 : index
    %20 = vector.load %arg2[%c0_6, %c0_7] : memref<1x32xf32, #tpu.memory_space<vmem>>, vector<1x32xf32>
    %21 = vector.broadcast %20 : vector<1x32xf32> to vector<8x32xf32>
    %22 = arith.mulf %19, %21 : vector<8x32xf32>
    %c0_8 = arith.constant 0 : index
    %c0_9 = arith.constant 0 : index
    %23 = vector.load %arg3[%c0_8, %c0_9] : memref<1x32xf32, #tpu.memory_space<vmem>>, vector<1x32xf32>
    %24 = vector.broadcast %23 : vector<1x32xf32> to vector<8x32xf32>
    %25 = arith.addf %22, %24 : vector<8x32xf32>
    %c0_10 = arith.constant 0 : index
    %c0_11 = arith.constant 0 : index
    %26 = vector.load %arg4[%c0_10, %c0_11] : memref<32x32xf32, #tpu.memory_space<vmem>>, vector<32x32xf32>
    %cst_12 = arith.constant dense<0.000000e+00> : vector<8x32xf32>
    %27 = tpu.matmul %25, %26, %cst_12 {dimension_numbers = #tpu.dot_dimension_numbers<[1], [0], [0], [1], [0, 0, 1, 1], [], []>} : vector<8x32xf32>, vector<32x32xf32>, vector<8x32xf32> -> vector<8x32xf32>
    %c0_13 = arith.constant 0 : index
    %c0_14 = arith.constant 0 : index
    %28 = vector.load %arg5[%c0_13, %c0_14] : memref<1x32xf32, #tpu.memory_space<vmem>>, vector<1x32xf32>
    %29 = vector.broadcast %28 : vector<1x32xf32> to vector<8x32xf32>
    %30 = arith.addf %27, %29 : vector<8x32xf32>
    %c0_15 = arith.constant 0 : index
    %c0_16 = arith.constant 0 : index
    %31 = vector.load %arg6[%c0_15, %c0_16] : memref<32x32xf32, #tpu.memory_space<vmem>>, vector<32x32xf32>
    %cst_17 = arith.constant dense<0.000000e+00> : vector<8x32xf32>
    %32 = tpu.matmul %25, %31, %cst_17 {dimension_numbers = #tpu.dot_dimension_numbers<[1], [0], [0], [1], [0, 0, 1, 1], [], []>} : vector<8x32xf32>, vector<32x32xf32>, vector<8x32xf32> -> vector<8x32xf32>
    %c0_18 = arith.constant 0 : index
    %c0_19 = arith.constant 0 : index
    %33 = vector.load %arg7[%c0_18, %c0_19] : memref<1x32xf32, #tpu.memory_space<vmem>>, vector<1x32xf32>
    %34 = vector.broadcast %33 : vector<1x32xf32> to vector<8x32xf32>
    %35 = arith.addf %32, %34 : vector<8x32xf32>
    %c0_20 = arith.constant 0 : index
    %c0_21 = arith.constant 0 : index
    %36 = vector.load %arg8[%c0_20, %c0_21] : memref<32x32xf32, #tpu.memory_space<vmem>>, vector<32x32xf32>
    %cst_22 = arith.constant dense<0.000000e+00> : vector<8x32xf32>
    %37 = tpu.matmul %25, %36, %cst_22 {dimension_numbers = #tpu.dot_dimension_numbers<[1], [0], [0], [1], [0, 0, 1, 1], [], []>} : vector<8x32xf32>, vector<32x32xf32>, vector<8x32xf32> -> vector<8x32xf32>
    %c0_23 = arith.constant 0 : index
    %c0_24 = arith.constant 0 : index
    %38 = vector.load %arg9[%c0_23, %c0_24] : memref<1x32xf32, #tpu.memory_space<vmem>>, vector<1x32xf32>
    %39 = vector.broadcast %38 : vector<1x32xf32> to vector<8x32xf32>
    %40 = arith.addf %37, %39 : vector<8x32xf32>
    %c0_25 = arith.constant 0 : index
    %c0_26 = arith.constant 0 : index
    %41 = vector.load %arg10[%c0_25, %c0_26] : memref<32x32xf32, #tpu.memory_space<vmem>>, vector<32x32xf32>
    %cst_27 = arith.constant 0.000000e+00 : f32
    %42 = vector.broadcast %cst_27 : f32 to vector<8x32xf32>
    %43 = vector.extract_strided_slice %30 {offsets = [0, 0], sizes = [8, 8], strides = [1, 1]} : vector<8x32xf32> to vector<8x8xf32>
    %44 = vector.extract_strided_slice %35 {offsets = [0, 0], sizes = [8, 8], strides = [1, 1]} : vector<8x32xf32> to vector<8x8xf32>
    %45 = vector.extract_strided_slice %40 {offsets = [0, 0], sizes = [8, 8], strides = [1, 1]} : vector<8x32xf32> to vector<8x8xf32>
    %cst_28 = arith.constant dense<0.000000e+00> : vector<8x8xf32>
    %46 = tpu.matmul %43, %44, %cst_28 {dimension_numbers = #tpu.dot_dimension_numbers<[1], [1], [0], [0], [0, 0, 1, 0], [], []>} : vector<8x8xf32>, vector<8x8xf32>, vector<8x8xf32> -> vector<8x8xf32>
    %cst_29 = arith.constant 0.353553385 : f32
    %47 = vector.broadcast %cst_29 : f32 to vector<8x8xf32>
    %48 = arith.mulf %46, %47 : vector<8x8xf32>
    %cst_30 = arith.constant dense<0xFF800000> : vector<8xf32>
    %49 = vector.multi_reduction <maximumf>, %48, %cst_30 [0] : vector<8x8xf32> to vector<8xf32>
    %50 = vector.shape_cast %49 : vector<8xf32> to vector<1x8xf32>
    %51 = vector.broadcast %50 : vector<1x8xf32> to vector<8x8xf32>
    %52 = arith.subf %48, %51 : vector<8x8xf32>
    %53 = math.exp %52 : vector<8x8xf32>
    %cst_31 = arith.constant dense<0.000000e+00> : vector<8xf32>
    %54 = vector.multi_reduction <add>, %53, %cst_31 [0] : vector<8x8xf32> to vector<8xf32>
    %55 = vector.shape_cast %54 : vector<8xf32> to vector<1x8xf32>
    %56 = vector.broadcast %55 : vector<1x8xf32> to vector<8x8xf32>
    %57 = arith.divf %53, %56 : vector<8x8xf32>
    %cst_32 = arith.constant dense<0.000000e+00> : vector<8x8xf32>
    %58 = tpu.matmul %57, %45, %cst_32 {dimension_numbers = #tpu.dot_dimension_numbers<[1], [0], [0], [1], [0, 0, 1, 1], [], []>} : vector<8x8xf32>, vector<8x8xf32>, vector<8x8xf32> -> vector<8x8xf32>
    %59 = vector.extract_strided_slice %41 {offsets = [0, 0], sizes = [8, 32], strides = [1, 1]} : vector<32x32xf32> to vector<8x32xf32>
    %cst_33 = arith.constant dense<0.000000e+00> : vector<8x32xf32>
    %60 = tpu.matmul %58, %59, %cst_33 {dimension_numbers = #tpu.dot_dimension_numbers<[1], [0], [0], [1], [0, 0, 1, 1], [], []>} : vector<8x8xf32>, vector<8x32xf32>, vector<8x32xf32> -> vector<8x32xf32>
    %61 = arith.addf %42, %60 : vector<8x32xf32>
    %62 = vector.extract_strided_slice %30 {offsets = [0, 8], sizes = [8, 8], strides = [1, 1]} : vector<8x32xf32> to vector<8x8xf32>
    %63 = vector.extract_strided_slice %35 {offsets = [0, 8], sizes = [8, 8], strides = [1, 1]} : vector<8x32xf32> to vector<8x8xf32>
    %64 = vector.extract_strided_slice %40 {offsets = [0, 8], sizes = [8, 8], strides = [1, 1]} : vector<8x32xf32> to vector<8x8xf32>
    %cst_34 = arith.constant dense<0.000000e+00> : vector<8x8xf32>
    %65 = tpu.matmul %62, %63, %cst_34 {dimension_numbers = #tpu.dot_dimension_numbers<[1], [1], [0], [0], [0, 0, 1, 0], [], []>} : vector<8x8xf32>, vector<8x8xf32>, vector<8x8xf32> -> vector<8x8xf32>
    %cst_35 = arith.constant 0.353553385 : f32
    %66 = vector.broadcast %cst_35 : f32 to vector<8x8xf32>
    %67 = arith.mulf %65, %66 : vector<8x8xf32>
    %cst_36 = arith.constant dense<0xFF800000> : vector<8xf32>
    %68 = vector.multi_reduction <maximumf>, %67, %cst_36 [0] : vector<8x8xf32> to vector<8xf32>
    %69 = vector.shape_cast %68 : vector<8xf32> to vector<1x8xf32>
    %70 = vector.broadcast %69 : vector<1x8xf32> to vector<8x8xf32>
    %71 = arith.subf %67, %70 : vector<8x8xf32>
    %72 = math.exp %71 : vector<8x8xf32>
    %cst_37 = arith.constant dense<0.000000e+00> : vector<8xf32>
    %73 = vector.multi_reduction <add>, %72, %cst_37 [0] : vector<8x8xf32> to vector<8xf32>
    %74 = vector.shape_cast %73 : vector<8xf32> to vector<1x8xf32>
    %75 = vector.broadcast %74 : vector<1x8xf32> to vector<8x8xf32>
    %76 = arith.divf %72, %75 : vector<8x8xf32>
    %cst_38 = arith.constant dense<0.000000e+00> : vector<8x8xf32>
    %77 = tpu.matmul %76, %64, %cst_38 {dimension_numbers = #tpu.dot_dimension_numbers<[1], [0], [0], [1], [0, 0, 1, 1], [], []>} : vector<8x8xf32>, vector<8x8xf32>, vector<8x8xf32> -> vector<8x8xf32>
    %78 = vector.extract_strided_slice %41 {offsets = [8, 0], sizes = [8, 32], strides = [1, 1]} : vector<32x32xf32> to vector<8x32xf32>
    %cst_39 = arith.constant dense<0.000000e+00> : vector<8x32xf32>
    %79 = tpu.matmul %77, %78, %cst_39 {dimension_numbers = #tpu.dot_dimension_numbers<[1], [0], [0], [1], [0, 0, 1, 1], [], []>} : vector<8x8xf32>, vector<8x32xf32>, vector<8x32xf32> -> vector<8x32xf32>
    %80 = arith.addf %61, %79 : vector<8x32xf32>
    %81 = vector.extract_strided_slice %30 {offsets = [0, 16], sizes = [8, 8], strides = [1, 1]} : vector<8x32xf32> to vector<8x8xf32>
    %82 = vector.extract_strided_slice %35 {offsets = [0, 16], sizes = [8, 8], strides = [1, 1]} : vector<8x32xf32> to vector<8x8xf32>
    %83 = vector.extract_strided_slice %40 {offsets = [0, 16], sizes = [8, 8], strides = [1, 1]} : vector<8x32xf32> to vector<8x8xf32>
    %cst_40 = arith.constant dense<0.000000e+00> : vector<8x8xf32>
    %84 = tpu.matmul %81, %82, %cst_40 {dimension_numbers = #tpu.dot_dimension_numbers<[1], [1], [0], [0], [0, 0, 1, 0], [], []>} : vector<8x8xf32>, vector<8x8xf32>, vector<8x8xf32> -> vector<8x8xf32>
    %cst_41 = arith.constant 0.353553385 : f32
    %85 = vector.broadcast %cst_41 : f32 to vector<8x8xf32>
    %86 = arith.mulf %84, %85 : vector<8x8xf32>
    %cst_42 = arith.constant dense<0xFF800000> : vector<8xf32>
    %87 = vector.multi_reduction <maximumf>, %86, %cst_42 [0] : vector<8x8xf32> to vector<8xf32>
    %88 = vector.shape_cast %87 : vector<8xf32> to vector<1x8xf32>
    %89 = vector.broadcast %88 : vector<1x8xf32> to vector<8x8xf32>
    %90 = arith.subf %86, %89 : vector<8x8xf32>
    %91 = math.exp %90 : vector<8x8xf32>
    %cst_43 = arith.constant dense<0.000000e+00> : vector<8xf32>
    %92 = vector.multi_reduction <add>, %91, %cst_43 [0] : vector<8x8xf32> to vector<8xf32>
    %93 = vector.shape_cast %92 : vector<8xf32> to vector<1x8xf32>
    %94 = vector.broadcast %93 : vector<1x8xf32> to vector<8x8xf32>
    %95 = arith.divf %91, %94 : vector<8x8xf32>
    %cst_44 = arith.constant dense<0.000000e+00> : vector<8x8xf32>
    %96 = tpu.matmul %95, %83, %cst_44 {dimension_numbers = #tpu.dot_dimension_numbers<[1], [0], [0], [1], [0, 0, 1, 1], [], []>} : vector<8x8xf32>, vector<8x8xf32>, vector<8x8xf32> -> vector<8x8xf32>
    %97 = vector.extract_strided_slice %41 {offsets = [16, 0], sizes = [8, 32], strides = [1, 1]} : vector<32x32xf32> to vector<8x32xf32>
    %cst_45 = arith.constant dense<0.000000e+00> : vector<8x32xf32>
    %98 = tpu.matmul %96, %97, %cst_45 {dimension_numbers = #tpu.dot_dimension_numbers<[1], [0], [0], [1], [0, 0, 1, 1], [], []>} : vector<8x8xf32>, vector<8x32xf32>, vector<8x32xf32> -> vector<8x32xf32>
    %99 = arith.addf %80, %98 : vector<8x32xf32>
    %100 = vector.extract_strided_slice %30 {offsets = [0, 24], sizes = [8, 8], strides = [1, 1]} : vector<8x32xf32> to vector<8x8xf32>
    %101 = vector.extract_strided_slice %35 {offsets = [0, 24], sizes = [8, 8], strides = [1, 1]} : vector<8x32xf32> to vector<8x8xf32>
    %102 = vector.extract_strided_slice %40 {offsets = [0, 24], sizes = [8, 8], strides = [1, 1]} : vector<8x32xf32> to vector<8x8xf32>
    %cst_46 = arith.constant dense<0.000000e+00> : vector<8x8xf32>
    %103 = tpu.matmul %100, %101, %cst_46 {dimension_numbers = #tpu.dot_dimension_numbers<[1], [1], [0], [0], [0, 0, 1, 0], [], []>} : vector<8x8xf32>, vector<8x8xf32>, vector<8x8xf32> -> vector<8x8xf32>
    %cst_47 = arith.constant 0.353553385 : f32
    %104 = vector.broadcast %cst_47 : f32 to vector<8x8xf32>
    %105 = arith.mulf %103, %104 : vector<8x8xf32>
    %cst_48 = arith.constant dense<0xFF800000> : vector<8xf32>
    %106 = vector.multi_reduction <maximumf>, %105, %cst_48 [0] : vector<8x8xf32> to vector<8xf32>
    %107 = vector.shape_cast %106 : vector<8xf32> to vector<1x8xf32>
    %108 = vector.broadcast %107 : vector<1x8xf32> to vector<8x8xf32>
    %109 = arith.subf %105, %108 : vector<8x8xf32>
    %110 = math.exp %109 : vector<8x8xf32>
    %cst_49 = arith.constant dense<0.000000e+00> : vector<8xf32>
    %111 = vector.multi_reduction <add>, %110, %cst_49 [0] : vector<8x8xf32> to vector<8xf32>
    %112 = vector.shape_cast %111 : vector<8xf32> to vector<1x8xf32>
    %113 = vector.broadcast %112 : vector<1x8xf32> to vector<8x8xf32>
    %114 = arith.divf %110, %113 : vector<8x8xf32>
    %cst_50 = arith.constant dense<0.000000e+00> : vector<8x8xf32>
    %115 = tpu.matmul %114, %102, %cst_50 {dimension_numbers = #tpu.dot_dimension_numbers<[1], [0], [0], [1], [0, 0, 1, 1], [], []>} : vector<8x8xf32>, vector<8x8xf32>, vector<8x8xf32> -> vector<8x8xf32>
    %116 = vector.extract_strided_slice %41 {offsets = [24, 0], sizes = [8, 32], strides = [1, 1]} : vector<32x32xf32> to vector<8x32xf32>
    %cst_51 = arith.constant dense<0.000000e+00> : vector<8x32xf32>
    %117 = tpu.matmul %115, %116, %cst_51 {dimension_numbers = #tpu.dot_dimension_numbers<[1], [0], [0], [1], [0, 0, 1, 1], [], []>} : vector<8x8xf32>, vector<8x32xf32>, vector<8x32xf32> -> vector<8x32xf32>
    %118 = arith.addf %99, %117 : vector<8x32xf32>
    %119 = arith.addf %1, %118 : vector<8x32xf32>
    %cst_52 = arith.constant dense<0.000000e+00> : vector<8xf32>
    %120 = vector.multi_reduction <add>, %119, %cst_52 [1] : vector<8x32xf32> to vector<8xf32>
    %121 = vector.shape_cast %120 : vector<8xf32> to vector<8x1xf32>
    %cst_53 = arith.constant 3.200000e+01 : f32
    %122 = vector.broadcast %cst_53 : f32 to vector<8x1xf32>
    %123 = arith.divf %121, %122 : vector<8x1xf32>
    %124 = vector.broadcast %123 : vector<8x1xf32> to vector<8x32xf32>
    %125 = arith.subf %119, %124 : vector<8x32xf32>
    %126 = arith.mulf %125, %125 : vector<8x32xf32>
    %cst_54 = arith.constant dense<0.000000e+00> : vector<8xf32>
    %127 = vector.multi_reduction <add>, %126, %cst_54 [1] : vector<8x32xf32> to vector<8xf32>
    %128 = vector.shape_cast %127 : vector<8xf32> to vector<8x1xf32>
    %cst_55 = arith.constant 3.200000e+01 : f32
    %129 = vector.broadcast %cst_55 : f32 to vector<8x1xf32>
    %130 = arith.divf %128, %129 : vector<8x1xf32>
    %131 = vector.broadcast %123 : vector<8x1xf32> to vector<8x32xf32>
    %132 = arith.subf %119, %131 : vector<8x32xf32>
    %cst_56 = arith.constant 9.99999974E-6 : f32
    %133 = vector.broadcast %cst_56 : f32 to vector<8x1xf32>
    %134 = arith.addf %130, %133 : vector<8x1xf32>
    %135 = math.rsqrt %134 : vector<8x1xf32>
    %136 = vector.broadcast %135 : vector<8x1xf32> to vector<8x32xf32>
    %137 = arith.mulf %132, %136 : vector<8x32xf32>
    %c0_57 = arith.constant 0 : index
    %c0_58 = arith.constant 0 : index
    %138 = vector.load %arg11[%c0_57, %c0_58] : memref<1x32xf32, #tpu.memory_space<vmem>>, vector<1x32xf32>
    %139 = vector.broadcast %138 : vector<1x32xf32> to vector<8x32xf32>
    %140 = arith.mulf %137, %139 : vector<8x32xf32>
    %c0_59 = arith.constant 0 : index
    %c0_60 = arith.constant 0 : index
    %141 = vector.load %arg12[%c0_59, %c0_60] : memref<1x32xf32, #tpu.memory_space<vmem>>, vector<1x32xf32>
    %142 = vector.broadcast %141 : vector<1x32xf32> to vector<8x32xf32>
    %143 = arith.addf %140, %142 : vector<8x32xf32>
    %c0_61 = arith.constant 0 : index
    %c0_62 = arith.constant 0 : index
    %144 = vector.load %arg13[%c0_61, %c0_62] : memref<32x64xf32, #tpu.memory_space<vmem>>, vector<32x64xf32>
    %cst_63 = arith.constant dense<0.000000e+00> : vector<8x64xf32>
    %145 = tpu.matmul %143, %144, %cst_63 {dimension_numbers = #tpu.dot_dimension_numbers<[1], [0], [0], [1], [0, 0, 1, 1], [], []>} : vector<8x32xf32>, vector<32x64xf32>, vector<8x64xf32> -> vector<8x64xf32>
    %c0_64 = arith.constant 0 : index
    %c0_65 = arith.constant 0 : index
    %146 = vector.load %arg14[%c0_64, %c0_65] : memref<1x64xf32, #tpu.memory_space<vmem>>, vector<1x64xf32>
    %147 = vector.broadcast %146 : vector<1x64xf32> to vector<8x64xf32>
    %148 = arith.addf %145, %147 : vector<8x64xf32>
    %cst_66 = arith.constant 5.000000e-01 : f32
    %149 = vector.broadcast %cst_66 : f32 to vector<8x64xf32>
    %150 = arith.mulf %149, %148 : vector<8x64xf32>
    %cst_67 = arith.constant 4.471500e-02 : f32
    %151 = vector.broadcast %cst_67 : f32 to vector<8x64xf32>
    %152 = arith.mulf %151, %148 : vector<8x64xf32>
    %153 = arith.mulf %152, %148 : vector<8x64xf32>
    %154 = arith.mulf %153, %148 : vector<8x64xf32>
    %155 = arith.addf %148, %154 : vector<8x64xf32>
    %cst_68 = arith.constant 0.797884583 : f32
    %156 = vector.broadcast %cst_68 : f32 to vector<8x64xf32>
    %157 = arith.mulf %156, %155 : vector<8x64xf32>
    %158 = math.tanh %157 : vector<8x64xf32>
    %cst_69 = arith.constant 1.000000e+00 : f32
    %159 = vector.broadcast %cst_69 : f32 to vector<8x64xf32>
    %160 = arith.addf %159, %158 : vector<8x64xf32>
    %161 = arith.mulf %150, %160 : vector<8x64xf32>
    %c0_70 = arith.constant 0 : index
    %c0_71 = arith.constant 0 : index
    %162 = vector.load %arg15[%c0_70, %c0_71] : memref<64x32xf32, #tpu.memory_space<vmem>>, vector<64x32xf32>
    %cst_72 = arith.constant dense<0.000000e+00> : vector<8x32xf32>
    %163 = tpu.matmul %161, %162, %cst_72 {dimension_numbers = #tpu.dot_dimension_numbers<[1], [0], [0], [1], [0, 0, 1, 1], [], []>} : vector<8x64xf32>, vector<64x32xf32>, vector<8x32xf32> -> vector<8x32xf32>
    %c0_73 = arith.constant 0 : index
    %c0_74 = arith.constant 0 : index
    %164 = vector.load %arg16[%c0_73, %c0_74] : memref<1x32xf32, #tpu.memory_space<vmem>>, vector<1x32xf32>
    %165 = vector.broadcast %164 : vector<1x32xf32> to vector<8x32xf32>
    %166 = arith.addf %163, %165 : vector<8x32xf32>
    %167 = arith.addf %119, %166 : vector<8x32xf32>
    %c0_75 = arith.constant 0 : index
    %c0_76 = arith.constant 0 : index
    %c0_77 = arith.constant 0 : index
    %168 = vector.load %arg17[%c0_75, %c0_76, %c0_77] : memref<1x8x32xf32, #tpu.memory_space<vmem>>, vector<1x8x32xf32>
    %169 = vector.shape_cast %168 : vector<1x8x32xf32> to vector<8x32xf32>
    %170 = vector.shape_cast %167 : vector<8x32xf32> to vector<1x8x32xf32>
    tpu.vector_store %arg17[%c0_75, %c0_76, %c0_77], %170 {strides = array<i32>} : memref<1x8x32xf32, #tpu.memory_space<vmem>>, vector<1x8x32xf32>,
    return
  }
  func.func @transform_0(%arg0: i32) -> (i32, i32, i32) {
    %c0_i32 = arith.constant 0 : i32
    %c0_i32_0 = arith.constant 0 : i32
    %c0_i32_1 = arith.constant 0 : i32
    return %arg0, %c0_i32, %c0_i32_0 : i32, i32, i32
  }
  func.func @transform_1(%arg0: i32) -> (i32, i32) {
    %c0_i32 = arith.constant 0 : i32
    %c0_i32_0 = arith.constant 0 : i32
    %c0_i32_1 = arith.constant 0 : i32
    return %c0_i32, %c0_i32_0 : i32, i32
  }
  func.func @transform_2(%arg0: i32) -> (i32, i32) {
    %c0_i32 = arith.constant 0 : i32
    %c0_i32_0 = arith.constant 0 : i32
    %c0_i32_1 = arith.constant 0 : i32
    return %c0_i32, %c0_i32_0 : i32, i32
  }
  func.func @transform_3(%arg0: i32) -> (i32, i32) {
    %c0_i32 = arith.constant 0 : i32
    %c0_i32_0 = arith.constant 0 : i32
    %c0_i32_1 = arith.constant 0 : i32
    return %c0_i32, %c0_i32_0 : i32, i32
  }
  func.func @transform_4(%arg0: i32) -> (i32, i32) {
    %c0_i32 = arith.constant 0 : i32
    %c0_i32_0 = arith.constant 0 : i32
    %c0_i32_1 = arith.constant 0 : i32
    return %c0_i32, %c0_i32_0 : i32, i32
  }
  func.func @transform_5(%arg0: i32) -> (i32, i32) {
    %c0_i32 = arith.constant 0 : i32
    %c0_i32_0 = arith.constant 0 : i32
    %c0_i32_1 = arith.constant 0 : i32
    return %c0_i32, %c0_i32_0 : i32, i32
  }
  func.func @transform_6(%arg0: i32) -> (i32, i32) {
    %c0_i32 = arith.constant 0 : i32
    %c0_i32_0 = arith.constant 0 : i32
    %c0_i32_1 = arith.constant 0 : i32
    return %c0_i32, %c0_i32_0 : i32, i32
  }
  func.func @transform_7(%arg0: i32) -> (i32, i32) {
    %c0_i32 = arith.constant 0 : i32
    %c0_i32_0 = arith.constant 0 : i32
    %c0_i32_1 = arith.constant 0 : i32
    return %c0_i32, %c0_i32_0 : i32, i32
  }
  func.func @transform_8(%arg0: i32) -> (i32, i32) {
    %c0_i32 = arith.constant 0 : i32
    %c0_i32_0 = arith.constant 0 : i32
    %c0_i32_1 = arith.constant 0 : i32
    return %c0_i32, %c0_i32_0 : i32, i32
  }
  func.func @transform_9(%arg0: i32) -> (i32, i32) {
    %c0_i32 = arith.constant 0 : i32
    %c0_i32_0 = arith.constant 0 : i32
    %c0_i32_1 = arith.constant 0 : i32
    return %c0_i32, %c0_i32_0 : i32, i32
  }
  func.func @transform_10(%arg0: i32) -> (i32, i32) {
    %c0_i32 = arith.constant 0 : i32
    %c0_i32_0 = arith.constant 0 : i32
    %c0_i32_1 = arith.constant 0 : i32
    return %c0_i32, %c0_i32_0 : i32, i32
  }
  func.func @transform_11(%arg0: i32) -> (i32, i32) {
    %c0_i32 = arith.constant 0 : i32
    %c0_i32_0 = arith.constant 0 : i32
    %c0_i32_1 = arith.constant 0 : i32
    return %c0_i32, %c0_i32_0 : i32, i32
  }
  func.func @transform_12(%arg0: i32) -> (i32, i32) {
    %c0_i32 = arith.constant 0 : i32
    %c0_i32_0 = arith.constant 0 : i32
    %c0_i32_1 = arith.constant 0 : i32
    return %c0_i32, %c0_i32_0 : i32, i32
  }
  func.func @transform_13(%arg0: i32) -> (i32, i32) {
    %c0_i32 = arith.constant 0 : i32
    %c0_i32_0 = arith.constant 0 : i32
    %c0_i32_1 = arith.constant 0 : i32
    return %c0_i32, %c0_i32_0 : i32, i32
  }
  func.func @transform_14(%arg0: i32) -> (i32, i32) {
    %c0_i32 = arith.constant 0 : i32
    %c0_i32_0 = arith.constant 0 : i32
    %c0_i32_1 = arith.constant 0 : i32
    return %c0_i32, %c0_i32_0 : i32, i32
  }
  func.func @transform_15(%arg0: i32) -> (i32, i32) {
    %c0_i32 = arith.constant 0 : i32
    %c0_i32_0 = arith.constant 0 : i32
    %c0_i32_1 = arith.constant 0 : i32
    return %c0_i32, %c0_i32_0 : i32, i32
  }
  func.func @transform_16(%arg0: i32) -> (i32, i32, i32) {
    %c0_i32 = arith.constant 0 : i32
    %c0_i32_0 = arith.constant 0 : i32
    %c0_i32_1 = arith.constant 0 : i32
    return %arg0, %c0_i32, %c0_i32_0 : i32, i32, i32
  }
}

</mosaic_0001>

<llo_original>
// kernel: transformer_block.1
$region0: #{transformer_block.1}
  #allocation0 [shape = 'u32[]', space=smem, size = 0x4, offset = 0x4, fixed_abs, tag = 'smem constant byte address 0x4 - core index']
  #allocation1 [shape = 'u32[144,128]{1,0:T(1,128)}', space=vmem, size = 0x12000, scoped, tag = 'internal scratch']
  %s0 = inlined_call_operand.hbm [shape: f32[2,8,32], index: 0, kind: input, shape index: {}]
  %s1 = inlined_call_operand.vmem [shape: f32[1,32], index: 1, kind: input, shape index: {}]
  %s2 = inlined_call_operand.vmem [shape: f32[1,32], index: 2, kind: input, shape index: {}]
  %s3 = inlined_call_operand.vmem [shape: f32[32,32], index: 3, kind: input, shape index: {}]
  %s4 = inlined_call_operand.vmem [shape: f32[1,32], index: 4, kind: input, shape index: {}]
  %s5 = inlined_call_operand.vmem [shape: f32[32,32], index: 5, kind: input, shape index: {}]
  %s6 = inlined_call_operand.vmem [shape: f32[1,32], index: 6, kind: input, shape index: {}]
  %s7 = inlined_call_operand.vmem [shape: f32[32,32], index: 7, kind: input, shape index: {}]
  %s8 = inlined_call_operand.vmem [shape: f32[1,32], index: 8, kind: input, shape index: {}]
  %s9 = inlined_call_operand.hbm [shape: f32[32,32], index: 9, kind: input, shape index: {}]
  %s10 = inlined_call_operand.vmem [shape: f32[1,32], index: 10, kind: input, shape index: {}]
  %s11 = inlined_call_operand.vmem [shape: f32[1,32], index: 11, kind: input, shape index: {}]
  %s12 = inlined_call_operand.hbm [shape: f32[32,64], index: 12, kind: input, shape index: {}]
  %s13 = inlined_call_operand.hbm [shape: f32[1,64], index: 13, kind: input, shape index: {}]
  %s14 = inlined_call_operand.vmem [shape: f32[64,32], index: 14, kind: input, shape index: {}]
  %s15 = inlined_call_operand.hbm [shape: f32[1,32], index: 15, kind: input, shape index: {}]
  %s16 = inlined_call_operand.hbm [shape: f32[2,8,32], index: 16, kind: output, shape index: {}]
  %s17 = sld [smem:[#allocation0]]
  $region117: #{transformer_block.1} parent=0
    _
  %s19 = ssub.s32 1, %s17
  %s20 = scalar_select 0, %s19, %s17
  $region1: #{transformer_block.1} parent=0
    #allocation2 [shape = 'u8[8192]{0}', space=vmem, size = 0x2000, scoped, tag = 'input window, operand 0']
    #allocation3 [shape = 's32[2]{0}', space=sflag, size = 0x8, scoped, tag = 'scoped memory for transformer_block.1']
    #allocation4 [shape = 's32[2]{0}', space=sflag, size = 0x8, scoped, tag = 'scoped memory for transformer_block.1']
    #allocation5 [shape = 'u8[16384]{0}', space=vmem, size = 0x4000, scoped, tag = 'input window, operand 9, single buffered']
    #allocation6 [shape = 's32[1]{0}', space=sflag, size = 0x4, scoped, tag = 'scoped memory for transformer_block.1']
    #allocation7 [shape = 'u8[16384]{0}', space=vmem, size = 0x4000, scoped, tag = 'input window, operand 12, single buffered']
    #allocation8 [shape = 'u8[512]{0}', space=vmem, size = 0x400, scoped, tag = 'input window, operand 13, single buffered']
    #allocation9 [shape = 's32[1]{0}', space=sflag, size = 0x4, scoped, tag = 'scoped memory for transformer_block.1']
    #allocation10 [shape = 'u8[512]{0}', space=vmem, size = 0x400, scoped, tag = 'input window, operand 15, single buffered']
    #allocation11 [shape = 'u8[8192]{0}', space=vmem, size = 0x2000, scoped, tag = 'output window, operand 0']
    %21 = vsyncpa [#allocation3], 0
    %s22 = scalar_lea.sflag [#allocation3], 1
    %23 = vsyncpa %s22, 0
    %24 = vsyncpa [#allocation6], 0
    %25 = vsyncpa [#allocation9], 0
    %26 = vsyncpa [#allocation4], 0
    %s27 = scalar_lea.sflag [#allocation4], 1
    %28 = vsyncpa %s27, 0
    loop: start=0, step=1, limit=4
    $region2: #{transformer_block.1} parent=1 // loop_pre_header
      _
    $region3: #{transformer_block.1} parent=1 // loop_header
      %s30 = sphi 0, %s34
      %p31 = scmp.ge.s32.totalorder %s30, 4
      %s40 = sphi 0, %s42
      %s43 = sphi 0, %s40
      %s44 = sphi 0, %s43
      %s60 = sphi 0, %s44
      %s64 = sphi 0, %s64
      %s66 = sphi 0, %s64
      %s67 = sphi 0, %s66
      %s81 = sphi 0, %s67
      %s85 = sphi 0, %s85
      %s87 = sphi 0, %s85
      %s88 = sphi 0, %s87
      %s102 = sphi 0, %s88
      %s106 = sphi 0, %s106
      %s108 = sphi 0, %s106
      %s109 = sphi 0, %s108
      %s123 = sphi 0, %s109
      %s127 = sphi 0, %s127
      %s129 = sphi 0, %s127
      %s130 = sphi 0, %s129
      %s144 = sphi 0, %s130
      %s148 = sphi 0, %s148
      %s150 = sphi 0, %s148
      %s151 = sphi 0, %s150
      %s165 = sphi 0, %s151
      %s169 = sphi 0, %s169
      %s171 = sphi 0, %s169
      %s172 = sphi 0, %s171
      %s186 = sphi 0, %s172
      %s190 = sphi 0, %s190
      %s192 = sphi 0, %s190
      %s193 = sphi 0, %s192
      %s207 = sphi 0, %s193
      %s211 = sphi 0, %s211
      %s213 = sphi 0, %s211
      %s214 = sphi 0, %s213
      %s228 = sphi 0, %s214
      %s232 = sphi 0, %s232
      %s234 = sphi 0, %s232
      %s235 = sphi 0, %s234
      %s249 = sphi 0, %s235
      %s253 = sphi 0, %s253
      %s255 = sphi 0, %s253
      %s256 = sphi 0, %s255
      %s270 = sphi 0, %s256
      %s274 = sphi 0, %s274
      %s276 = sphi 0, %s274
      %s277 = sphi 0, %s276
      %s291 = sphi 0, %s277
      %s295 = sphi 0, %s295
      %s297 = sphi 0, %s295
      %s298 = sphi 0, %s297
      %s312 = sphi 0, %s298
      %s316 = sphi 0, %s316
      %s318 = sphi 0, %s316
      %s319 = sphi 0, %s318
      %s333 = sphi 0, %s319
      %s337 = sphi 0, %s337
      %s339 = sphi 0, %s337
      %s340 = sphi 0, %s339
      %s354 = sphi 0, %s340
      %s358 = sphi 0, %s358
      %s360 = sphi 0, %s358
      %s361 = sphi 0, %s360
      %s375 = sphi 0, %s361
      %s381 = sphi 0, %s383
      %s384 = sphi 0, %s381
      %s385 = sphi 0, %s384
      %s401 = sphi 0, %s385
    $region4: #{transformer_block.1} parent=1 // loop_header_branch
      %33 = sbr.rel (%p31) target = $region8
    $region5: #{transformer_block.1} parent=1 // loop_body
      %s35 = ssub.s32 %s30, 1
      %s36 = ssub.s32 %s30, 2
      %s37 = sadd.s32 %s30, 1
      %s38 = ssub.s32 %s30, %s37
      %p39 = scmp.eq.s32.totalorder %s38, 0
      %s41 = sadd.s32 %s40, 1
      %s42 = scalar_select %p39, %s40, %s41
      %p45 = pneg %p39
      %p46 = scmp.eq.s32.totalorder %s30, 1
      %p47 = por %p45, %p46
      %p48 = scmp.ne.s32.totalorder %s40, %s43
      %p49 = scmp.eq.s32.totalorder %s30, 0
      %p50 = por %p48, %p49
      %p51 = scmp.ne.s32.totalorder %s40, %s43
      %p52 = scmp.eq.s32.totalorder %s35, 1
      %p53 = por %p51, %p52
      %p54 = scmp.ne.s32.totalorder %s43, %s44
      %p55 = scmp.eq.s32.totalorder %s35, 0
      %p56 = por %p54, %p55
      %p57 = scmp.ne.s32.totalorder %s43, %s44
      %p58 = scmp.eq.s32.totalorder %s36, 1
      %p59 = por %p57, %p58
      %p61 = scmp.ne.s32.totalorder %s44, %s60
      %p62 = scmp.eq.s32.totalorder %s36, 0
      %p63 = por %p61, %p62
      %s65 = sadd.s32 %s64, 1
      %p68 = scmp.eq.s32.totalorder %s30, 1
      %p69 = scmp.ne.s32.totalorder %s64, %s66
      %p70 = scmp.eq.s32.totalorder %s30, 0
      %p71 = por %p69, %p70
      %p72 = scmp.ne.s32.totalorder %s64, %s66
      %p73 = scmp.eq.s32.totalorder %s35, 1
      %p74 = por %p72, %p73
      %p75 = scmp.ne.s32.totalorder %s66, %s67
      %p76 = scmp.eq.s32.totalorder %s35, 0
      %p77 = por %p75, %p76
      %p78 = scmp.ne.s32.totalorder %s66, %s67
      %p79 = scmp.eq.s32.totalorder %s36, 1
      %p80 = por %p78, %p79
      %p82 = scmp.ne.s32.totalorder %s67, %s81
      %p83 = scmp.eq.s32.totalorder %s36, 0
      %p84 = por %p82, %p83
      %s86 = sadd.s32 %s85, 1
      %p89 = scmp.eq.s32.totalorder %s30, 1
      %p90 = scmp.ne.s32.totalorder %s85, %s87
      %p91 = scmp.eq.s32.totalorder %s30, 0
      %p92 = por %p90, %p91
      %p93 = scmp.ne.s32.totalorder %s85, %s87
      %p94 = scmp.eq.s32.totalorder %s35, 1
      %p95 = por %p93, %p94
      %p96 = scmp.ne.s32.totalorder %s87, %s88
      %p97 = scmp.eq.s32.totalorder %s35, 0
      %p98 = por %p96, %p97
      %p99 = scmp.ne.s32.totalorder %s87, %s88
      %p100 = scmp.eq.s32.totalorder %s36, 1
      %p101 = por %p99, %p100
      %p103 = scmp.ne.s32.totalorder %s88, %s102
      %p104 = scmp.eq.s32.totalorder %s36, 0
      %p105 = por %p103, %p104
      %s107 = sadd.s32 %s106, 1
      %p110 = scmp.eq.s32.totalorder %s30, 1
      %p111 = scmp.ne.s32.totalorder %s106, %s108
      %p112 = scmp.eq.s32.totalorder %s30, 0
      %p113 = por %p111, %p112
      %p114 = scmp.ne.s32.totalorder %s106, %s108
      %p115 = scmp.eq.s32.totalorder %s35, 1
      %p116 = por %p114, %p115
      %p117 = scmp.ne.s32.totalorder %s108, %s109
      %p118 = scmp.eq.s32.totalorder %s35, 0
      %p119 = por %p117, %p118
      %p120 = scmp.ne.s32.totalorder %s108, %s109
      %p121 = scmp.eq.s32.totalorder %s36, 1
      %p122 = por %p120, %p121
      %p124 = scmp.ne.s32.totalorder %s109, %s123
      %p125 = scmp.eq.s32.totalorder %s36, 0
      %p126 = por %p124, %p125
      %s128 = sadd.s32 %s127, 1
      %p131 = scmp.eq.s32.totalorder %s30, 1
      %p132 = scmp.ne.s32.totalorder %s127, %s129
      %p133 = scmp.eq.s32.totalorder %s30, 0
      %p134 = por %p132, %p133
      %p135 = scmp.ne.s32.totalorder %s127, %s129
      %p136 = scmp.eq.s32.totalorder %s35, 1
      %p137 = por %p135, %p136
      %p138 = scmp.ne.s32.totalorder %s129, %s130
      %p139 = scmp.eq.s32.totalorder %s35, 0
      %p140 = por %p138, %p139
      %p141 = scmp.ne.s32.totalorder %s129, %s130
      %p142 = scmp.eq.s32.totalorder %s36, 1
      %p143 = por %p141, %p142
      %p145 = scmp.ne.s32.totalorder %s130, %s144
      %p146 = scmp.eq.s32.totalorder %s36, 0
      %p147 = por %p145, %p146
      %s149 = sadd.s32 %s148, 1
      %p152 = scmp.eq.s32.totalorder %s30, 1
      %p153 = scmp.ne.s32.totalorder %s148, %s150
      %p154 = scmp.eq.s32.totalorder %s30, 0
      %p155 = por %p153, %p154
      %p156 = scmp.ne.s32.totalorder %s148, %s150
      %p157 = scmp.eq.s32.totalorder %s35, 1
      %p158 = por %p156, %p157
      %p159 = scmp.ne.s32.totalorder %s150, %s151
      %p160 = scmp.eq.s32.totalorder %s35, 0
      %p161 = por %p159, %p160
      %p162 = scmp.ne.s32.totalorder %s150, %s151
      %p163 = scmp.eq.s32.totalorder %s36, 1
      %p164 = por %p162, %p163
      %p166 = scmp.ne.s32.totalorder %s151, %s165
      %p167 = scmp.eq.s32.totalorder %s36, 0
      %p168 = por %p166, %p167
      %s170 = sadd.s32 %s169, 1
      %p173 = scmp.eq.s32.totalorder %s30, 1
      %p174 = scmp.ne.s32.totalorder %s169, %s171
      %p175 = scmp.eq.s32.totalorder %s30, 0
      %p176 = por %p174, %p175
      %p177 = scmp.ne.s32.totalorder %s169, %s171
      %p178 = scmp.eq.s32.totalorder %s35, 1
      %p179 = por %p177, %p178
      %p180 = scmp.ne.s32.totalorder %s171, %s172
      %p181 = scmp.eq.s32.totalorder %s35, 0
      %p182 = por %p180, %p181
      %p183 = scmp.ne.s32.totalorder %s171, %s172
      %p184 = scmp.eq.s32.totalorder %s36, 1
      %p185 = por %p183, %p184
      %p187 = scmp.ne.s32.totalorder %s172, %s186
      %p188 = scmp.eq.s32.totalorder %s36, 0
      %p189 = por %p187, %p188
      %s191 = sadd.s32 %s190, 1
      %p194 = scmp.eq.s32.totalorder %s30, 1
      %p195 = scmp.ne.s32.totalorder %s190, %s192
      %p196 = scmp.eq.s32.totalorder %s30, 0
      %p197 = por %p195, %p196
      %p198 = scmp.ne.s32.totalorder %s190, %s192
      %p199 = scmp.eq.s32.totalorder %s35, 1
      %p200 = por %p198, %p199
      %p201 = scmp.ne.s32.totalorder %s192, %s193
      %p202 = scmp.eq.s32.totalorder %s35, 0
      %p203 = por %p201, %p202
      %p204 = scmp.ne.s32.totalorder %s192, %s193
      %p205 = scmp.eq.s32.totalorder %s36, 1
      %p206 = por %p204, %p205
      %p208 = scmp.ne.s32.totalorder %s193, %s207
      %p209 = scmp.eq.s32.totalorder %s36, 0
      %p210 = por %p208, %p209
      %s212 = sadd.s32 %s211, 1
      %p215 = scmp.eq.s32.totalorder %s30, 1
      %p216 = scmp.ne.s32.totalorder %s211, %s213
      %p217 = scmp.eq.s32.totalorder %s30, 0
      %p218 = por %p216, %p217
      %p219 = scmp.ne.s32.totalorder %s211, %s213
      %p220 = scmp.eq.s32.totalorder %s35, 1
      %p221 = por %p219, %p220
      %p222 = scmp.ne.s32.totalorder %s213, %s214
      %p223 = scmp.eq.s32.totalorder %s35, 0
      %p224 = por %p222, %p223
      %p225 = scmp.ne.s32.totalorder %s213, %s214
      %p226 = scmp.eq.s32.totalorder %s36, 1
      %p227 = por %p225, %p226
      %p229 = scmp.ne.s32.totalorder %s214, %s228
      %p230 = scmp.eq.s32.totalorder %s36, 0
      %p231 = por %p229, %p230
      %s233 = sadd.s32 %s232, 1
      %p236 = scmp.eq.s32.totalorder %s30, 1
      %p237 = scmp.ne.s32.totalorder %s232, %s234
      %p238 = scmp.eq.s32.totalorder %s30, 0
      %p239 = por %p237, %p238
      %p240 = scmp.ne.s32.totalorder %s232, %s234
      %p241 = scmp.eq.s32.totalorder %s35, 1
      %p242 = por %p240, %p241
      %p243 = scmp.ne.s32.totalorder %s234, %s235
      %p244 = scmp.eq.s32.totalorder %s35, 0
      %p245 = por %p243, %p244
      %p246 = scmp.ne.s32.totalorder %s234, %s235
      %p247 = scmp.eq.s32.totalorder %s36, 1
      %p248 = por %p246, %p247
      %p250 = scmp.ne.s32.totalorder %s235, %s249
      %p251 = scmp.eq.s32.totalorder %s36, 0
      %p252 = por %p250, %p251
      %s254 = sadd.s32 %s253, 1
      %p257 = scmp.eq.s32.totalorder %s30, 1
      %p258 = scmp.ne.s32.totalorder %s253, %s255
      %p259 = scmp.eq.s32.totalorder %s30, 0
      %p260 = por %p258, %p259
      %p261 = scmp.ne.s32.totalorder %s253, %s255
      %p262 = scmp.eq.s32.totalorder %s35, 1
      %p263 = por %p261, %p262
      %p264 = scmp.ne.s32.totalorder %s255, %s256
      %p265 = scmp.eq.s32.totalorder %s35, 0
      %p266 = por %p264, %p265
      %p267 = scmp.ne.s32.totalorder %s255, %s256
      %p268 = scmp.eq.s32.totalorder %s36, 1
      %p269 = por %p267, %p268
      %p271 = scmp.ne.s32.totalorder %s256, %s270
      %p272 = scmp.eq.s32.totalorder %s36, 0
      %p273 = por %p271, %p272
      %s275 = sadd.s32 %s274, 1
      %p278 = scmp.eq.s32.totalorder %s30, 1
      %p279 = scmp.ne.s32.totalorder %s274, %s276
      %p280 = scmp.eq.s32.totalorder %s30, 0
      %p281 = por %p279, %p280
      %p282 = scmp.ne.s32.totalorder %s274, %s276
      %p283 = scmp.eq.s32.totalorder %s35, 1
      %p284 = por %p282, %p283
      %p285 = scmp.ne.s32.totalorder %s276, %s277
      %p286 = scmp.eq.s32.totalorder %s35, 0
      %p287 = por %p285, %p286
      %p288 = scmp.ne.s32.totalorder %s276, %s277
      %p289 = scmp.eq.s32.totalorder %s36, 1
      %p290 = por %p288, %p289
      %p292 = scmp.ne.s32.totalorder %s277, %s291
      %p293 = scmp.eq.s32.totalorder %s36, 0
      %p294 = por %p292, %p293
      %s296 = sadd.s32 %s295, 1
      %p299 = scmp.eq.s32.totalorder %s30, 1
      %p300 = scmp.ne.s32.totalorder %s295, %s297
      %p301 = scmp.eq.s32.totalorder %s30, 0
      %p302 = por %p300, %p301
      %p303 = scmp.ne.s32.totalorder %s295, %s297
      %p304 = scmp.eq.s32.totalorder %s35, 1
      %p305 = por %p303, %p304
      %p306 = scmp.ne.s32.totalorder %s297, %s298
      %p307 = scmp.eq.s32.totalorder %s35, 0
      %p308 = por %p306, %p307
      %p309 = scmp.ne.s32.totalorder %s297, %s298
      %p310 = scmp.eq.s32.totalorder %s36, 1
      %p311 = por %p309, %p310
      %p313 = scmp.ne.s32.totalorder %s298, %s312
      %p314 = scmp.eq.s32.totalorder %s36, 0
      %p315 = por %p313, %p314
      %s317 = sadd.s32 %s316, 1
      %p320 = scmp.eq.s32.totalorder %s30, 1
      %p321 = scmp.ne.s32.totalorder %s316, %s318
      %p322 = scmp.eq.s32.totalorder %s30, 0
      %p323 = por %p321, %p322
      %p324 = scmp.ne.s32.totalorder %s316, %s318
      %p325 = scmp.eq.s32.totalorder %s35, 1
      %p326 = por %p324, %p325
      %p327 = scmp.ne.s32.totalorder %s318, %s319
      %p328 = scmp.eq.s32.totalorder %s35, 0
      %p329 = por %p327, %p328
      %p330 = scmp.ne.s32.totalorder %s318, %s319
      %p331 = scmp.eq.s32.totalorder %s36, 1
      %p332 = por %p330, %p331
      %p334 = scmp.ne.s32.totalorder %s319, %s333
      %p335 = scmp.eq.s32.totalorder %s36, 0
      %p336 = por %p334, %p335
      %s338 = sadd.s32 %s337, 1
      %p341 = scmp.eq.s32.totalorder %s30, 1
      %p342 = scmp.ne.s32.totalorder %s337, %s339
      %p343 = scmp.eq.s32.totalorder %s30, 0
      %p344 = por %p342, %p343
      %p345 = scmp.ne.s32.totalorder %s337, %s339
      %p346 = scmp.eq.s32.totalorder %s35, 1
      %p347 = por %p345, %p346
      %p348 = scmp.ne.s32.totalorder %s339, %s340
      %p349 = scmp.eq.s32.totalorder %s35, 0
      %p350 = por %p348, %p349
      %p351 = scmp.ne.s32.totalorder %s339, %s340
      %p352 = scmp.eq.s32.totalorder %s36, 1
      %p353 = por %p351, %p352
      %p355 = scmp.ne.s32.totalorder %s340, %s354
      %p356 = scmp.eq.s32.totalorder %s36, 0
      %p357 = por %p355, %p356
      %s359 = sadd.s32 %s358, 1
      %p362 = scmp.eq.s32.totalorder %s30, 1
      %p363 = scmp.ne.s32.totalorder %s358, %s360
      %p364 = scmp.eq.s32.totalorder %s30, 0
      %p365 = por %p363, %p364
      %p366 = scmp.ne.s32.totalorder %s358, %s360
      %p367 = scmp.eq.s32.totalorder %s35, 1
      %p368 = por %p366, %p367
      %p369 = scmp.ne.s32.totalorder %s360, %s361
      %p370 = scmp.eq.s32.totalorder %s35, 0
      %p371 = por %p369, %p370
      %p372 = scmp.ne.s32.totalorder %s360, %s361
      %p373 = scmp.eq.s32.totalorder %s36, 1
      %p374 = por %p372, %p373
      %p376 = scmp.ne.s32.totalorder %s361, %s375
      %p377 = scmp.eq.s32.totalorder %s36, 0
      %p378 = por %p376, %p377
      %s379 = ssub.s32 %s30, %s37
      %p380 = scmp.eq.s32.totalorder %s379, 0
      %s382 = sadd.s32 %s381, 1
      %s383 = scalar_select %p380, %s381, %s382
      %p386 = pneg %p380
      %p387 = scmp.eq.s32.totalorder %s30, 1
      %p388 = por %p386, %p387
      %p389 = scmp.ne.s32.totalorder %s381, %s384
      %p390 = scmp.eq.s32.totalorder %s30, 0
      %p391 = por %p389, %p390
      %p392 = scmp.ne.s32.totalorder %s381, %s384
      %p393 = scmp.eq.s32.totalorder %s35, 1
      %p394 = por %p392, %p393
      %p395 = scmp.ne.s32.totalorder %s384, %s385
      %p396 = scmp.eq.s32.totalorder %s35, 0
      %p397 = por %p395, %p396
      %p398 = scmp.ne.s32.totalorder %s384, %s385
      %p399 = scmp.eq.s32.totalorder %s36, 1
      %p400 = por %p398, %p399
      %p402 = scmp.ne.s32.totalorder %s385, %s401
      %p403 = scmp.eq.s32.totalorder %s36, 0
      %p404 = por %p402, %p403
      %p405 = scmp.le.s32.totalorder 1, %s30
      %p406 = scmp.lt.s32.totalorder %s30, 3
      %p407 = pnand %p405, %p406
      %p408 = pneg %p407
      // Predicated region
      $region9: #{transformer_block.1} parent=5 // pred_check
        _
      $region10: #{transformer_block.1} parent=5 // pred_check_branch
        %410 = sbr.rel (%p407) target = $region12
      $region11: #{transformer_block.1} parent=5 // pred_region
        %s411 = ssub.s32 %s30, 1
        // Predicated region
        $region13: #{transformer_block.1} parent=11 // pred_check
          %p412 = pneg %p77
        $region14: #{transformer_block.1} parent=11 // pred_check_branch
          %414 = sbr.rel (%p412) target = $region16
        $region15: #{transformer_block.1} parent=11 // pred_region
          _
        $region16: #{transformer_block.1} parent=11 // pred_fallthru
          _
        // Predicated region
        $region17: #{transformer_block.1} parent=11 // pred_check
          %p415 = pneg %p98
        $region18: #{transformer_block.1} parent=11 // pred_check_branch
          %417 = sbr.rel (%p415) target = $region20
        $region19: #{transformer_block.1} parent=11 // pred_region
          _
        $region20: #{transformer_block.1} parent=11 // pred_fallthru
          _
        // Predicated region
        $region21: #{transformer_block.1} parent=11 // pred_check
          %p418 = pneg %p119
        $region22: #{transformer_block.1} parent=11 // pred_check_branch
          %420 = sbr.rel (%p418) target = $region24
        $region23: #{transformer_block.1} parent=11 // pred_region
          _
        $region24: #{transformer_block.1} parent=11 // pred_fallthru
          _
        // Predicated region
        $region25: #{transformer_block.1} parent=11 // pred_check
          %p421 = pneg %p140
        $region26: #{transformer_block.1} parent=11 // pred_check_branch
          %423 = sbr.rel (%p421) target = $region28
        $region27: #{transformer_block.1} parent=11 // pred_region
          _
        $region28: #{transformer_block.1} parent=11 // pred_fallthru
          _
        // Predicated region
        $region29: #{transformer_block.1} parent=11 // pred_check
          %p424 = pneg %p161
        $region30: #{transformer_block.1} parent=11 // pred_check_branch
          %426 = sbr.rel (%p424) target = $region32
        $region31: #{transformer_block.1} parent=11 // pred_region
          _
        $region32: #{transformer_block.1} parent=11 // pred_fallthru
          _
        // Predicated region
        $region33: #{transformer_block.1} parent=11 // pred_check
          %p427 = pneg %p182
        $region34: #{transformer_block.1} parent=11 // pred_check_branch
          %429 = sbr.rel (%p427) target = $region36
        $region35: #{transformer_block.1} parent=11 // pred_region
          _
        $region36: #{transformer_block.1} parent=11 // pred_fallthru
          _
        // Predicated region
        $region37: #{transformer_block.1} parent=11 // pred_check
          %p430 = pneg %p203
        $region38: #{transformer_block.1} parent=11 // pred_check_branch
          %432 = sbr.rel (%p430) target = $region40
        $region39: #{transformer_block.1} parent=11 // pred_region
          _
        $region40: #{transformer_block.1} parent=11 // pred_fallthru
          _
        // Predicated region
        $region41: #{transformer_block.1} parent=11 // pred_check
          %p433 = pneg %p224
        $region42: #{transformer_block.1} parent=11 // pred_check_branch
          %435 = sbr.rel (%p433) target = $region44
        $region43: #{transformer_block.1} parent=11 // pred_region
          _
        $region44: #{transformer_block.1} parent=11 // pred_fallthru
          _
        // Predicated region
        $region45: #{transformer_block.1} parent=11 // pred_check
          %p436 = pneg %p245
        $region46: #{transformer_block.1} parent=11 // pred_check_branch
          %438 = sbr.rel (%p436) target = $region48
        $region47: #{transformer_block.1} parent=11 // pred_region
          %s440 = ssub.s32 512, 512
          %441 = vsyncadd [#allocation6], %s440
          %s442 = sshll.u32 [#allocation5], 4
          %s443 = int_to_ptr.vmem [resolvable:$true] %s442
          %448 = dma.hbm_to_vmem [thread:$0]  %s9, 512, %s443, [#allocation6], 128, 128, 8
        $region48: #{transformer_block.1} parent=11 // pred_fallthru
          _
        // Predicated region
        $region49: #{transformer_block.1} parent=11 // pred_check
          %p449 = pneg %p266
        $region50: #{transformer_block.1} parent=11 // pred_check_branch
          %451 = sbr.rel (%p449) target = $region52
        $region51: #{transformer_block.1} parent=11 // pred_region
          _
        $region52: #{transformer_block.1} parent=11 // pred_fallthru
          _
        // Predicated region
        $region53: #{transformer_block.1} parent=11 // pred_check
          %p452 = pneg %p287
        $region54: #{transformer_block.1} parent=11 // pred_check_branch
          %454 = sbr.rel (%p452) target = $region56
        $region55: #{transformer_block.1} parent=11 // pred_region
          _
        $region56: #{transformer_block.1} parent=11 // pred_fallthru
          _
        // Predicated region
        $region57: #{transformer_block.1} parent=11 // pred_check
          %p455 = pneg %p308
        $region58: #{transformer_block.1} parent=11 // pred_check_branch
          %457 = sbr.rel (%p455) target = $region60
        $region59: #{transformer_block.1} parent=11 // pred_region
          %s459 = ssub.s32 512, 512
          %460 = vsyncadd [#allocation6], %s459
          %s461 = sshll.u32 [#allocation7], 4
          %s462 = int_to_ptr.vmem [resolvable:$true] %s461
          %467 = dma.hbm_to_vmem [thread:$0]  %s12, 512, %s462, [#allocation6], 128, 128, 8
        $region60: #{transformer_block.1} parent=11 // pred_fallthru
          _
        // Predicated region
        $region61: #{transformer_block.1} parent=11 // pred_check
          %p468 = pneg %p329
        $region62: #{transformer_block.1} parent=11 // pred_check_branch
          %470 = sbr.rel (%p468) target = $region64
        $region63: #{transformer_block.1} parent=11 // pred_region
          %s472 = ssub.s32 16, 16
          %473 = vsyncadd [#allocation9], %s472
          %s475 = sshll.u32 [#allocation8], 4
          %s476 = int_to_ptr.vmem [resolvable:$true] %s475
          %478 = dma.hbm_to_vmem [thread:$0]  %s13, 16, %s476, [#allocation9]
        $region64: #{transformer_block.1} parent=11 // pred_fallthru
          _
        // Predicated region
        $region65: #{transformer_block.1} parent=11 // pred_check
          %p479 = pneg %p350
        $region66: #{transformer_block.1} parent=11 // pred_check_branch
          %481 = sbr.rel (%p479) target = $region68
        $region67: #{transformer_block.1} parent=11 // pred_region
          _
        $region68: #{transformer_block.1} parent=11 // pred_fallthru
          _
        // Predicated region
        $region69: #{transformer_block.1} parent=11 // pred_check
          %p482 = pneg %p371
        $region70: #{transformer_block.1} parent=11 // pred_check_branch
          %484 = sbr.rel (%p482) target = $region72
        $region71: #{transformer_block.1} parent=11 // pred_region
          %s486 = ssub.s32 16, 16
          %487 = vsyncadd [#allocation9], %s486
          %s489 = sshll.u32 [#allocation10], 4
          %s490 = int_to_ptr.vmem [resolvable:$true] %s489
          %492 = dma.hbm_to_vmem [thread:$0]  %s15, 16, %s490, [#allocation9]
        $region72: #{transformer_block.1} parent=11 // pred_fallthru
          _
      $region12: #{transformer_block.1} parent=5 // pred_fallthru
        _
      %p493 = scmp.lt.s32.totalorder %s30, 2
      // Predicated region
      $region73: #{transformer_block.1} parent=5 // pred_check
        %p494 = pneg %p493
      $region74: #{transformer_block.1} parent=5 // pred_check_branch
        %496 = sbr.rel (%p494) target = $region76
      $region75: #{transformer_block.1} parent=5 // pred_region
        // Predicated region
        $region77: #{transformer_block.1} parent=75 // pred_check
          %p497 = pneg %p50
        $region78: #{transformer_block.1} parent=75 // pred_check_branch
          %499 = sbr.rel (%p497) target = $region80
        $region79: #{transformer_block.1} parent=75 // pred_region
          %s500 = sand.u32 %s40, 1
          %s501 = scalar_lea.sflag [#allocation3], %s500
          %s502 = sand.u32 %s40, 1
          %s503 = smul.addr %s502, 8
          %s504 = scalar_lea.vmem [#allocation2], %s503
          %s506 = ssub.s32 128, 128
          %507 = vsyncadd %s501, %s506
          %s508 = smul.addr %s30, 128
          %s509 = scalar_lea.hbm %s0, %s508
          %s511 = sshll.u32 %s504, 4
          %s512 = int_to_ptr.vmem [resolvable:$true] %s511
          %514 = dma.hbm_to_vmem [thread:$0]  %s509, 128, %s512, %s501
        $region80: #{transformer_block.1} parent=75 // pred_fallthru
          _
      $region76: #{transformer_block.1} parent=5 // pred_fallthru
        _
      %p515 = scmp.le.s32.totalorder 1, %s30
      %p516 = scmp.lt.s32.totalorder %s30, 3
      %p517 = pnand %p515, %p516
      %p518 = pneg %p517
      // Predicated region
      $region81: #{transformer_block.1} parent=5 // pred_check
        _
      $region82: #{transformer_block.1} parent=5 // pred_check_branch
        %520 = sbr.rel (%p517) target = $region84
      $region83: #{transformer_block.1} parent=5 // pred_region
        %s521 = ssub.s32 %s30, 1
        %s522 = sand.u32 %s43, 1
        %s523 = scalar_lea.sflag [#allocation3], %s522
        %s524 = sand.u32 %s43, 1
        %s525 = smul.addr %s524, 8
        %s526 = scalar_lea.vmem [#allocation2], %s525
        // Predicated region
        $region85: #{transformer_block.1} parent=83 // pred_check
          %p527 = pneg %p56
        $region86: #{transformer_block.1} parent=83 // pred_check_branch
          %529 = sbr.rel (%p527) target = $region88
        $region87: #{transformer_block.1} parent=83 // pred_region
          %530 = dma.done %s523, 128
        $region88: #{transformer_block.1} parent=83 // pred_fallthru
          _
        // Predicated region
        $region89: #{transformer_block.1} parent=83 // pred_check
          %p531 = pneg %p245
        $region90: #{transformer_block.1} parent=83 // pred_check_branch
          %533 = sbr.rel (%p531) target = $region92
        $region91: #{transformer_block.1} parent=83 // pred_region
          %534 = dma.done [#allocation6], 512
        $region92: #{transformer_block.1} parent=83 // pred_fallthru
          _
        // Predicated region
        $region93: #{transformer_block.1} parent=83 // pred_check
          %p535 = pneg %p308
        $region94: #{transformer_block.1} parent=83 // pred_check_branch
          %537 = sbr.rel (%p535) target = $region96
        $region95: #{transformer_block.1} parent=83 // pred_region
          %538 = dma.done [#allocation6], 512
        $region96: #{transformer_block.1} parent=83 // pred_fallthru
          _
        // Predicated region
        $region97: #{transformer_block.1} parent=83 // pred_check
          %p539 = pneg %p329
        $region98: #{transformer_block.1} parent=83 // pred_check_branch
          %541 = sbr.rel (%p539) target = $region100
        $region99: #{transformer_block.1} parent=83 // pred_region
          %542 = dma.done [#allocation9], 16
        $region100: #{transformer_block.1} parent=83 // pred_fallthru
          _
        // Predicated region
        $region101: #{transformer_block.1} parent=83 // pred_check
          %p543 = pneg %p371
        $region102: #{transformer_block.1} parent=83 // pred_check_branch
          %545 = sbr.rel (%p543) target = $region104
        $region103: #{transformer_block.1} parent=83 // pred_region
          %546 = dma.done [#allocation9], 16
        $region104: #{transformer_block.1} parent=83 // pred_fallthru
          _
        %s547 = sand.u32 %s43, 1
        %s548 = scalar_lea.sflag [#allocation3], %s547
        %s549 = sand.u32 %s43, 1
        %s550 = smul.addr %s549, 8
        %s551 = scalar_lea.vmem [#allocation2], %s550
        %p552 = pneg %p56
        %p553 = pneg %p53
        %p554 = pneg %p77
        %p555 = pneg %p74
        %p556 = pneg %p98
        %p557 = pneg %p95
        %p558 = pneg %p119
        %p559 = pneg %p116
        %p560 = pneg %p140
        %p561 = pneg %p137
        %p562 = pneg %p161
        %p563 = pneg %p158
        %p564 = pneg %p182
        %p565 = pneg %p179
        %p566 = pneg %p203
        %p567 = pneg %p200
        %p568 = pneg %p224
        %p569 = pneg %p221
        %p570 = pneg %p245
        %p571 = pneg %p242
        %p572 = pneg %p266
        %p573 = pneg %p263
        %p574 = pneg %p287
        %p575 = pneg %p284
        %p576 = pneg %p308
        %p577 = pneg %p305
        %p578 = pneg %p329
        %p579 = pneg %p326
        %p580 = pneg %p350
        %p581 = pneg %p347
        %p582 = pneg %p371
        %p583 = pneg %p368
        %p584 = pneg %p397
        %p585 = pneg %p394
        %s586 = sand.u32 %s384, 1
        %s587 = scalar_lea.sflag [#allocation4], %s586
        %s588 = sand.u32 %s384, 1
        %s589 = smul.addr %s588, 8
        %s590 = scalar_lea.vmem [#allocation11], %s589
        %v591 = vld [vmem:[%s526] sm:$0xff]
        %vm592 = vcmask 261120
        %v593 = vsel %vm592, %v591, 0.0
        %594 = vadd.xlane.f32.xlu0 %v593
        %v595 = vpop.xlane.xlu0 %594
        %v596 = vrcp.pop 32.0
        %v597 = vmul.f32 %v595, %v596
        %v598 = vsub.f32 %v591, %v597
        %v599 = vmul.f32 %v598, %v598
        %v600 = vsel %vm592, %v599, 0.0
        %601 = vadd.xlane.f32.xlu0 %v600
        %v602 = vpop.xlane.xlu0 %601
        %v603 = vmul.f32 %v602, %v596
        %v604 = vadd.f32 %v603, 1e-05
        %v605 = vrsqrt.pop %v604
        %v606 = vmul.f32 %v598, %v605
        %v607 = vld [vmem:[%s1] sm:$0x1]
        %v609 = vlaneseq
        %v610 = vshrl.u32 %v609, 7
        %v611 = vsub.s32 0, %v610
        %v612 = vrot.slane %v607, %v611
        %v614 = vmul.f32 %v606, %v612
        %v615 = vld [vmem:[%s2] sm:$0x1]
        %v617 = vlaneseq
        %v618 = vshrl.u32 %v617, 7
        %v619 = vsub.s32 0, %v618
        %v620 = vrot.slane %v615, %v619
        %v622 = vadd.f32 %v614, %v620
        %v623 = vld [vmem:[%s3] sm:$0xff]
        %v624 = vld [vmem:[%s3 + $0x8] sm:$0xff]
        %v625 = vld [vmem:[%s3 + $0x10] sm:$0xff]
        %v626 = vld [vmem:[%s3 + $0x18] sm:$0xff]
        %v627 = vld [vmem:[%s4] sm:$0x1]
        %v629 = vlaneseq
        %v630 = vshrl.u32 %v629, 7
        %v631 = vsub.s32 0, %v630
        %v632 = vrot.slane %v627, %v631
        %v635 = vsel %vm592, %v622, 0
        %637 = vmatprep.subr.mxu0 0.0
        %638 = vmatpush1.msra.mxu0 %v623
        %639 = vmatprep.subr.mxu0 0.0
        %640 = vmatpush1.msra.mxu0 %v624
        %641 = vmatprep.subr.mxu0 0.0
        %642 = vmatpush1.msra.mxu0 %v625
        %643 = vmatprep.subr.mxu0 0.0
        %644 = vmatpush1.msra.mxu0 %v626
        %645 = vmatprep.subr.mxu0 0.0
        %646 = vmatpush1.msra.mxu0 0.0
        %647 = vmatprep.subr.mxu0 0.0
        %648 = vmatpush1.msra.mxu0 0.0
        %649 = vmatprep.subr.mxu0 0.0
        %650 = vmatpush1.msra.mxu0 0.0
        %651 = vmatprep.subr.mxu0 0.0
        %652 = vmatpush1.msra.mxu0 0.0
        %653 = vmatprep.subr.mxu0 0.0
        %654 = vmatpush1.msra.mxu0 0.0
        %655 = vmatprep.subr.mxu0 0.0
        %656 = vmatpush1.msra.mxu0 0.0
        %657 = vmatprep.subr.mxu0 0.0
        %658 = vmatpush1.msra.mxu0 0.0
        %659 = vmatprep.subr.mxu0 0.0
        %660 = vmatpush1.msra.mxu0 0.0
        %661 = vmatprep.subr.mxu0 0.0
        %662 = vmatpush1.msra.mxu0 0.0
        %663 = vmatprep.subr.mxu0 0.0
        %664 = vmatpush1.msra.mxu0 0.0
        %665 = vmatprep.subr.mxu0 0.0
        %666 = vmatpush1.msra.mxu0 0.0
        %667 = vmatprep.subr.mxu0 0.0
        %668 = vmatpush1.msra.mxu0 0.0
        %669 = vmatprep.subr.mxu0 0.0
        %670 = vmatpush1.msra.mxu0 0.0
        %671 = vmatprep.subr.mxu0 0.0
        %672 = vmatpush1.msra.mxu0 0.0
        %673 = vmatprep.subr.mxu0 0.0
        %674 = vmatpush1.msra.mxu0 0.0
        %675 = vmatprep.subr.mxu0 0.0
        %676 = vmatpush1.msra.mxu0 0.0
        %677 = vmatprep.subr.mxu0 0.0
        %678 = vmatpush1.msra.mxu0 0.0
        %679 = vmatprep.subr.mxu0 0.0
        %680 = vmatpush1.msra.mxu0 0.0
        %681 = vmatprep.subr.mxu0 0.0
        %682 = vmatpush1.msra.mxu0 0.0
        %683 = vmatprep.subr.mxu0 0.0
        %684 = vmatpush1.msra.mxu0 0.0
        %685 = vmatprep.subr.mxu0 0.0
        %686 = vmatpush1.msra.mxu0 0.0
        %687 = vmatprep.subr.mxu0 0.0
        %688 = vmatpush1.msra.mxu0 0.0
        %689 = vmatprep.subr.mxu0 0.0
        %690 = vmatpush1.msra.mxu0 0.0
        %691 = vmatprep.subr.mxu0 0.0
        %692 = vmatpush1.msra.mxu0 0.0
        %693 = vmatprep.subr.mxu0 0.0
        %694 = vmatpush1.msra.mxu0 0.0
        %695 = vmatprep.subr.mxu0 0.0
        %696 = vmatpush1.msra.mxu0 0.0
        %697 = vmatprep.subr.mxu0 0.0
        %698 = vmatpush1.msra.mxu0 0.0
        %699 = vmatprep.subr.mxu0 0.0
        %700 = vmatpush1.msra.mxu0 0.0
        %701 = vmatprep.mubr.f32.mxu0 0.0
        %702 = vmatmul.mubr.f32.gmra.mrb[0].mxu0 %v635
        %v703 = vpop.f32.mrb[0].mxu0
        %v704 = vadd.f32 %v632, %v703
        %v705 = vpop.f32.mrb[0].mxu0
        %706 = vdwg.mxu0
        %v707 = vld [vmem:[%s5] sm:$0xff]
        %v708 = vld [vmem:[%s5 + $0x8] sm:$0xff]
        %v709 = vld [vmem:[%s5 + $0x10] sm:$0xff]
        %v710 = vld [vmem:[%s5 + $0x18] sm:$0xff]
        %v711 = vld [vmem:[%s6] sm:$0x1]
        %v713 = vlaneseq
        %v714 = vshrl.u32 %v713, 7
        %v715 = vsub.s32 0, %v714
        %v716 = vrot.slane %v711, %v715
        %718 = vmatprep.subr.mxu0 0.0
        %719 = vmatpush1.msra.mxu0 %v707
        %720 = vmatprep.subr.mxu0 0.0
        %721 = vmatpush1.msra.mxu0 %v708
        %722 = vmatprep.subr.mxu0 0.0
        %723 = vmatpush1.msra.mxu0 %v709
        %724 = vmatprep.subr.mxu0 0.0
        %725 = vmatpush1.msra.mxu0 %v710
        %726 = vmatprep.subr.mxu0 0.0
        %727 = vmatpush1.msra.mxu0 0.0
        %728 = vmatprep.subr.mxu0 0.0
        %729 = vmatpush1.msra.mxu0 0.0
        %730 = vmatprep.subr.mxu0 0.0
        %731 = vmatpush1.msra.mxu0 0.0
        %732 = vmatprep.subr.mxu0 0.0
        %733 = vmatpush1.msra.mxu0 0.0
        %734 = vmatprep.subr.mxu0 0.0
        %735 = vmatpush1.msra.mxu0 0.0
        %736 = vmatprep.subr.mxu0 0.0
        %737 = vmatpush1.msra.mxu0 0.0
        %738 = vmatprep.subr.mxu0 0.0
        %739 = vmatpush1.msra.mxu0 0.0
        %740 = vmatprep.subr.mxu0 0.0
        %741 = vmatpush1.msra.mxu0 0.0
        %742 = vmatprep.subr.mxu0 0.0
        %743 = vmatpush1.msra.mxu0 0.0
        %744 = vmatprep.subr.mxu0 0.0
        %745 = vmatpush1.msra.mxu0 0.0
        %746 = vmatprep.subr.mxu0 0.0
        %747 = vmatpush1.msra.mxu0 0.0
        %748 = vmatprep.subr.mxu0 0.0
        %749 = vmatpush1.msra.mxu0 0.0
        %750 = vmatprep.subr.mxu0 0.0
        %751 = vmatpush1.msra.mxu0 0.0
        %752 = vmatprep.subr.mxu0 0.0
        %753 = vmatpush1.msra.mxu0 0.0
        %754 = vmatprep.subr.mxu0 0.0
        %755 = vmatpush1.msra.mxu0 0.0
        %756 = vmatprep.subr.mxu0 0.0
        %757 = vmatpush1.msra.mxu0 0.0
        %758 = vmatprep.subr.mxu0 0.0
        %759 = vmatpush1.msra.mxu0 0.0
        %760 = vmatprep.subr.mxu0 0.0
        %761 = vmatpush1.msra.mxu0 0.0
        %762 = vmatprep.subr.mxu0 0.0
        %763 = vmatpush1.msra.mxu0 0.0
        %764 = vmatprep.subr.mxu0 0.0
        %765 = vmatpush1.msra.mxu0 0.0
        %766 = vmatprep.subr.mxu0 0.0
        %767 = vmatpush1.msra.mxu0 0.0
        %768 = vmatprep.subr.mxu0 0.0
        %769 = vmatpush1.msra.mxu0 0.0
        %770 = vmatprep.subr.mxu0 0.0
        %771 = vmatpush1.msra.mxu0 0.0
        %772 = vmatprep.subr.mxu0 0.0
        %773 = vmatpush1.msra.mxu0 0.0
        %774 = vmatprep.subr.mxu0 0.0
        %775 = vmatpush1.msra.mxu0 0.0
        %776 = vmatprep.subr.mxu0 0.0
        %777 = vmatpush1.msra.mxu0 0.0
        %778 = vmatprep.subr.mxu0 0.0
        %779 = vmatpush1.msra.mxu0 0.0
        %780 = vmatprep.subr.mxu0 0.0
        %781 = vmatpush1.msra.mxu0 0.0
        %782 = vmatprep.mubr.f32.mxu0 0.0
        %783 = vmatmul.mubr.f32.gmra.mrb[0].mxu0 %v635
        %v784 = vpop.f32.mrb[0].mxu0
        %v785 = vadd.f32 %v716, %v784
        %v786 = vpop.f32.mrb[0].mxu0
        %787 = vdwg.mxu0
        %v788 = vld [vmem:[%s7] sm:$0xff]
        %v789 = vld [vmem:[%s7 + $0x8] sm:$0xff]
        %v790 = vld [vmem:[%s7 + $0x10] sm:$0xff]
        %v791 = vld [vmem:[%s7 + $0x18] sm:$0xff]
        %v792 = vld [vmem:[%s8] sm:$0x1]
        %v794 = vlaneseq
        %v795 = vshrl.u32 %v794, 7
        %v796 = vsub.s32 0, %v795
        %v797 = vrot.slane %v792, %v796
        %799 = vmatprep.subr.mxu0 0.0
        %800 = vmatpush1.msra.mxu0 %v788
        %801 = vmatprep.subr.mxu0 0.0
        %802 = vmatpush1.msra.mxu0 %v789
        %803 = vmatprep.subr.mxu0 0.0
        %804 = vmatpush1.msra.mxu0 %v790
        %805 = vmatprep.subr.mxu0 0.0
        %806 = vmatpush1.msra.mxu0 %v791
        %807 = vmatprep.subr.mxu0 0.0
        %808 = vmatpush1.msra.mxu0 0.0
        %809 = vmatprep.subr.mxu0 0.0
        %810 = vmatpush1.msra.mxu0 0.0
        %811 = vmatprep.subr.mxu0 0.0
        %812 = vmatpush1.msra.mxu0 0.0
        %813 = vmatprep.subr.mxu0 0.0
        %814 = vmatpush1.msra.mxu0 0.0
        %815 = vmatprep.subr.mxu0 0.0
        %816 = vmatpush1.msra.mxu0 0.0
        %817 = vmatprep.subr.mxu0 0.0
        %818 = vmatpush1.msra.mxu0 0.0
        %819 = vmatprep.subr.mxu0 0.0
        %820 = vmatpush1.msra.mxu0 0.0
        %821 = vmatprep.subr.mxu0 0.0
        %822 = vmatpush1.msra.mxu0 0.0
        %823 = vmatprep.subr.mxu0 0.0
        %824 = vmatpush1.msra.mxu0 0.0
        %825 = vmatprep.subr.mxu0 0.0
        %826 = vmatpush1.msra.mxu0 0.0
        %827 = vmatprep.subr.mxu0 0.0
        %828 = vmatpush1.msra.mxu0 0.0
        %829 = vmatprep.subr.mxu0 0.0
        %830 = vmatpush1.msra.mxu0 0.0
        %831 = vmatprep.subr.mxu0 0.0
        %832 = vmatpush1.msra.mxu0 0.0
        %833 = vmatprep.subr.mxu0 0.0
        %834 = vmatpush1.msra.mxu0 0.0
        %835 = vmatprep.subr.mxu0 0.0
        %836 = vmatpush1.msra.mxu0 0.0
        %837 = vmatprep.subr.mxu0 0.0
        %838 = vmatpush1.msra.mxu0 0.0
        %839 = vmatprep.subr.mxu0 0.0
        %840 = vmatpush1.msra.mxu0 0.0
        %841 = vmatprep.subr.mxu0 0.0
        %842 = vmatpush1.msra.mxu0 0.0
        %843 = vmatprep.subr.mxu0 0.0
        %844 = vmatpush1.msra.mxu0 0.0
        %845 = vmatprep.subr.mxu0 0.0
        %846 = vmatpush1.msra.mxu0 0.0
        %847 = vmatprep.subr.mxu0 0.0
        %848 = vmatpush1.msra.mxu0 0.0
        %849 = vmatprep.subr.mxu0 0.0
        %850 = vmatpush1.msra.mxu0 0.0
        %851 = vmatprep.subr.mxu0 0.0
        %852 = vmatpush1.msra.mxu0 0.0
        %853 = vmatprep.subr.mxu0 0.0
        %854 = vmatpush1.msra.mxu0 0.0
        %855 = vmatprep.subr.mxu0 0.0
        %856 = vmatpush1.msra.mxu0 0.0
        %857 = vmatprep.subr.mxu0 0.0
        %858 = vmatpush1.msra.mxu0 0.0
        %859 = vmatprep.subr.mxu0 0.0
        %860 = vmatpush1.msra.mxu0 0.0
        %861 = vmatprep.subr.mxu0 0.0
        %862 = vmatpush1.msra.mxu0 0.0
        %863 = vmatprep.mubr.f32.mxu0 0.0
        %864 = vmatmul.mubr.f32.gmra.mrb[0].mxu0 %v635
        %v865 = vpop.f32.mrb[0].mxu0
        %v866 = vadd.f32 %v797, %v865
        %v867 = vpop.f32.mrb[0].mxu0
        %868 = vdwg.mxu0
        %v869 = vld [vmem:[#allocation5] sm:$0xff]
        %v870 = vld [vmem:[#allocation5 + $0x8] sm:$0xff]
        %v871 = vld [vmem:[#allocation5 + $0x10] sm:$0xff]
        %v872 = vld [vmem:[#allocation5 + $0x18] sm:$0xff]
        %vm873 = vcmask 64512
        %v875 = vsel %vm873, %v704, 0
        %v878 = vsel %vm873, %v785, 0
        %880 = vmatprep.subr.mxu0 0.0
        %881 = vmatpush1.xpose.msra.mxu0 %v878
        %882 = vmatprep.subr.mxu0 0.0
        %883 = vmatpush1.xpose.msra.mxu0 0.0
        %884 = vmatprep.subr.mxu0 0.0
        %885 = vmatpush1.xpose.msra.mxu0 0.0
        %886 = vmatprep.subr.mxu0 0.0
        %887 = vmatpush1.xpose.msra.mxu0 0.0
        %888 = vmatprep.subr.mxu0 0.0
        %889 = vmatpush1.xpose.msra.mxu0 0.0
        %890 = vmatprep.subr.mxu0 0.0
        %891 = vmatpush1.xpose.msra.mxu0 0.0
        %892 = vmatprep.subr.mxu0 0.0
        %893 = vmatpush1.xpose.msra.mxu0 0.0
        %894 = vmatprep.subr.mxu0 0.0
        %895 = vmatpush1.xpose.msra.mxu0 0.0
        %896 = vmatprep.subr.mxu0 0.0
        %897 = vmatpush1.xpose.msra.mxu0 0.0
        %898 = vmatprep.subr.mxu0 0.0
        %899 = vmatpush1.xpose.msra.mxu0 0.0
        %900 = vmatprep.subr.mxu0 0.0
        %901 = vmatpush1.xpose.msra.mxu0 0.0
        %902 = vmatprep.subr.mxu0 0.0
        %903 = vmatpush1.xpose.msra.mxu0 0.0
        %904 = vmatprep.subr.mxu0 0.0
        %905 = vmatpush1.xpose.msra.mxu0 0.0
        %906 = vmatprep.subr.mxu0 0.0
        %907 = vmatpush1.xpose.msra.mxu0 0.0
        %908 = vmatprep.subr.mxu0 0.0
        %909 = vmatpush1.xpose.msra.mxu0 0.0
        %910 = vmatprep.subr.mxu0 0.0
        %911 = vmatpush1.xpose.msra.mxu0 0.0
        %912 = vmatprep.subr.mxu0 0.0
        %913 = vmatpush1.xpose.msra.mxu0 0.0
        %914 = vmatprep.subr.mxu0 0.0
        %915 = vmatpush1.xpose.msra.mxu0 0.0
        %916 = vmatprep.subr.mxu0 0.0
        %917 = vmatpush1.xpose.msra.mxu0 0.0
        %918 = vmatprep.subr.mxu0 0.0
        %919 = vmatpush1.xpose.msra.mxu0 0.0
        %920 = vmatprep.subr.mxu0 0.0
        %921 = vmatpush1.xpose.msra.mxu0 0.0
        %922 = vmatprep.subr.mxu0 0.0
        %923 = vmatpush1.xpose.msra.mxu0 0.0
        %924 = vmatprep.subr.mxu0 0.0
        %925 = vmatpush1.xpose.msra.mxu0 0.0
        %926 = vmatprep.subr.mxu0 0.0
        %927 = vmatpush1.xpose.msra.mxu0 0.0
        %928 = vmatprep.subr.mxu0 0.0
        %929 = vmatpush1.xpose.msra.mxu0 0.0
        %930 = vmatprep.subr.mxu0 0.0
        %931 = vmatpush1.xpose.msra.mxu0 0.0
        %932 = vmatprep.subr.mxu0 0.0
        %933 = vmatpush1.xpose.msra.mxu0 0.0
        %934 = vmatprep.subr.mxu0 0.0
        %935 = vmatpush1.xpose.msra.mxu0 0.0
        %936 = vmatprep.subr.mxu0 0.0
        %937 = vmatpush1.xpose.msra.mxu0 0.0
        %938 = vmatprep.subr.mxu0 0.0
        %939 = vmatpush1.xpose.msra.mxu0 0.0
        %940 = vmatprep.subr.mxu0 0.0
        %941 = vmatpush1.xpose.msra.mxu0 0.0
        %942 = vmatprep.subr.mxu0 0.0
        %943 = vmatpush1.xpose.msra.mxu0 0.0
        %944 = vmatprep.mubr.f32.mxu0 0.0
        %945 = vmatmul.mubr.f32.gmra.mrb[0].mxu0 %v875
        %v946 = vpop.f32.mrb[0].mxu0
        %v947 = vadd.f32 0.0, %v946
        %v948 = vpop.f32.mrb[0].mxu0
        %949 = vdwg.mxu0
        %v950 = vmul.f32 %v947, 0.35355338
        %v951 = vsel %vm873, %v950, -inf
        %v952 = vrot.slane %v951, 4
        %v953 = vmax.f32 %v951, %v952
        %v954 = vrot.slane %v953, 2
        %v955 = vmax.f32 %v953, %v954
        %v956 = vrot.slane %v955, 1
        %v957 = vmax.f32 %v955, %v956
        %v958 = vsub.f32 %v950, %v957
        %v959 = vmul.f32 %v958, 1.442695
        %v960 = vpow.pop %v959
        %v961 = vsel %vm873, %v960, 0.0
        %v962 = vrot.slane %v961, 4
        %v963 = vadd.f32 %v961, %v962
        %v964 = vrot.slane %v963, 2
        %v965 = vadd.f32 %v963, %v964
        %v966 = vrot.slane %v965, 1
        %v967 = vadd.f32 %v965, %v966
        %v968 = vrcp.pop %v967
        %v969 = vmul.f32 %v960, %v968
        %v971 = vsel %vm873, %v969, 0
        %973 = vmatprep.subr.mxu0 0.0
        %974 = vmatpush1.msra.mxu0 %v866
        %975 = vmatprep.subr.mxu0 0.0
        %976 = vmatpush1.msra.mxu0 0.0
        %977 = vmatprep.subr.mxu0 0.0
        %978 = vmatpush1.msra.mxu0 0.0
        %979 = vmatprep.subr.mxu0 0.0
        %980 = vmatpush1.msra.mxu0 0.0
        %981 = vmatprep.subr.mxu0 0.0
        %982 = vmatpush1.msra.mxu0 0.0
        %983 = vmatprep.subr.mxu0 0.0
        %984 = vmatpush1.msra.mxu0 0.0
        %985 = vmatprep.subr.mxu0 0.0
        %986 = vmatpush1.msra.mxu0 0.0
        %987 = vmatprep.subr.mxu0 0.0
        %988 = vmatpush1.msra.mxu0 0.0
        %989 = vmatprep.subr.mxu0 0.0
        %990 = vmatpush1.msra.mxu0 0.0
        %991 = vmatprep.subr.mxu0 0.0
        %992 = vmatpush1.msra.mxu0 0.0
        %993 = vmatprep.subr.mxu0 0.0
        %994 = vmatpush1.msra.mxu0 0.0
        %995 = vmatprep.subr.mxu0 0.0
        %996 = vmatpush1.msra.mxu0 0.0
        %997 = vmatprep.subr.mxu0 0.0
        %998 = vmatpush1.msra.mxu0 0.0
        %999 = vmatprep.subr.mxu0 0.0
        %1000 = vmatpush1.msra.mxu0 0.0
        %1001 = vmatprep.subr.mxu0 0.0
        %1002 = vmatpush1.msra.mxu0 0.0
        %1003 = vmatprep.subr.mxu0 0.0
        %1004 = vmatpush1.msra.mxu0 0.0
        %1005 = vmatprep.subr.mxu0 0.0
        %1006 = vmatpush1.msra.mxu0 0.0
        %1007 = vmatprep.subr.mxu0 0.0
        %1008 = vmatpush1.msra.mxu0 0.0
        %1009 = vmatprep.subr.mxu0 0.0
        %1010 = vmatpush1.msra.mxu0 0.0
        %1011 = vmatprep.subr.mxu0 0.0
        %1012 = vmatpush1.msra.mxu0 0.0
        %1013 = vmatprep.subr.mxu0 0.0
        %1014 = vmatpush1.msra.mxu0 0.0
        %1015 = vmatprep.subr.mxu0 0.0
        %1016 = vmatpush1.msra.mxu0 0.0
        %1017 = vmatprep.subr.mxu0 0.0
        %1018 = vmatpush1.msra.mxu0 0.0
        %1019 = vmatprep.subr.mxu0 0.0
        %1020 = vmatpush1.msra.mxu0 0.0
        %1021 = vmatprep.subr.mxu0 0.0
        %1022 = vmatpush1.msra.mxu0 0.0
        %1023 = vmatprep.subr.mxu0 0.0
        %1024 = vmatpush1.msra.mxu0 0.0
        %1025 = vmatprep.subr.mxu0 0.0
        %1026 = vmatpush1.msra.mxu0 0.0
        %1027 = vmatprep.subr.mxu0 0.0
        %1028 = vmatpush1.msra.mxu0 0.0
        %1029 = vmatprep.subr.mxu0 0.0
        %1030 = vmatpush1.msra.mxu0 0.0
        %1031 = vmatprep.subr.mxu0 0.0
        %1032 = vmatpush1.msra.mxu0 0.0
        %1033 = vmatprep.subr.mxu0 0.0
        %1034 = vmatpush1.msra.mxu0 0.0
        %1035 = vmatprep.subr.mxu0 0.0
        %1036 = vmatpush1.msra.mxu0 0.0
        %1037 = vmatprep.mubr.f32.mxu0 0.0
        %1038 = vmatmul.mubr.f32.gmra.mrb[0].mxu0 %v971
        %v1039 = vpop.f32.mrb[0].mxu0
        %v1040 = vadd.f32 0.0, %v1039
        %v1041 = vpop.f32.mrb[0].mxu0
        %1042 = vdwg.mxu0
        %1043 = vrot.lane.b32.xlu0 %v704, 120
        %v1044 = vpop.permute.xlu0 %1043
        %1045 = vrot.lane.b32.xlu0 %v785, 120
        %v1046 = vpop.permute.xlu0 %1045
        %v1047 = vsel %vm873, %v1044, 0
        %v1049 = vsel %vm873, %v1046, 0
        %1051 = vmatprep.subr.mxu0 0.0
        %1052 = vmatpush1.xpose.msra.mxu0 %v1049
        %1053 = vmatprep.subr.mxu0 0.0
        %1054 = vmatpush1.xpose.msra.mxu0 0.0
        %1055 = vmatprep.subr.mxu0 0.0
        %1056 = vmatpush1.xpose.msra.mxu0 0.0
        %1057 = vmatprep.subr.mxu0 0.0
        %1058 = vmatpush1.xpose.msra.mxu0 0.0
        %1059 = vmatprep.subr.mxu0 0.0
        %1060 = vmatpush1.xpose.msra.mxu0 0.0
        %1061 = vmatprep.subr.mxu0 0.0
        %1062 = vmatpush1.xpose.msra.mxu0 0.0
        %1063 = vmatprep.subr.mxu0 0.0
        %1064 = vmatpush1.xpose.msra.mxu0 0.0
        %1065 = vmatprep.subr.mxu0 0.0
        %1066 = vmatpush1.xpose.msra.mxu0 0.0
        %1067 = vmatprep.subr.mxu0 0.0
        %1068 = vmatpush1.xpose.msra.mxu0 0.0
        %1069 = vmatprep.subr.mxu0 0.0
        %1070 = vmatpush1.xpose.msra.mxu0 0.0
        %1071 = vmatprep.subr.mxu0 0.0
        %1072 = vmatpush1.xpose.msra.mxu0 0.0
        %1073 = vmatprep.subr.mxu0 0.0
        %1074 = vmatpush1.xpose.msra.mxu0 0.0
        %1075 = vmatprep.subr.mxu0 0.0
        %1076 = vmatpush1.xpose.msra.mxu0 0.0
        %1077 = vmatprep.subr.mxu0 0.0
        %1078 = vmatpush1.xpose.msra.mxu0 0.0
        %1079 = vmatprep.subr.mxu0 0.0
        %1080 = vmatpush1.xpose.msra.mxu0 0.0
        %1081 = vmatprep.subr.mxu0 0.0
        %1082 = vmatpush1.xpose.msra.mxu0 0.0
        %1083 = vmatprep.subr.mxu0 0.0
        %1084 = vmatpush1.xpose.msra.mxu0 0.0
        %1085 = vmatprep.subr.mxu0 0.0
        %1086 = vmatpush1.xpose.msra.mxu0 0.0
        %1087 = vmatprep.subr.mxu0 0.0
        %1088 = vmatpush1.xpose.msra.mxu0 0.0
        %1089 = vmatprep.subr.mxu0 0.0
        %1090 = vmatpush1.xpose.msra.mxu0 0.0
        %1091 = vmatprep.subr.mxu0 0.0
        %1092 = vmatpush1.xpose.msra.mxu0 0.0
        %1093 = vmatprep.subr.mxu0 0.0
        %1094 = vmatpush1.xpose.msra.mxu0 0.0
        %1095 = vmatprep.subr.mxu0 0.0
        %1096 = vmatpush1.xpose.msra.mxu0 0.0
        %1097 = vmatprep.subr.mxu0 0.0
        %1098 = vmatpush1.xpose.msra.mxu0 0.0
        %1099 = vmatprep.subr.mxu0 0.0
        %1100 = vmatpush1.xpose.msra.mxu0 0.0
        %1101 = vmatprep.subr.mxu0 0.0
        %1102 = vmatpush1.xpose.msra.mxu0 0.0
        %1103 = vmatprep.subr.mxu0 0.0
        %1104 = vmatpush1.xpose.msra.mxu0 0.0
        %1105 = vmatprep.subr.mxu0 0.0
        %1106 = vmatpush1.xpose.msra.mxu0 0.0
        %1107 = vmatprep.subr.mxu0 0.0
        %1108 = vmatpush1.xpose.msra.mxu0 0.0
        %1109 = vmatprep.subr.mxu0 0.0
        %1110 = vmatpush1.xpose.msra.mxu0 0.0
        %1111 = vmatprep.subr.mxu0 0.0
        %1112 = vmatpush1.xpose.msra.mxu0 0.0
        %1113 = vmatprep.subr.mxu0 0.0
        %1114 = vmatpush1.xpose.msra.mxu0 0.0
        %1115 = vmatprep.mubr.f32.mxu0 0.0
        %1116 = vmatmul.mubr.f32.gmra.mrb[0].mxu0 %v1047
        %v1117 = vpop.f32.mrb[0].mxu0
        %v1118 = vadd.f32 0.0, %v1117
        %v1119 = vpop.f32.mrb[0].mxu0
        %1120 = vdwg.mxu0
        %v1121 = vmul.f32 %v1118, 0.35355338
        %v1122 = vsel %vm873, %v1121, -inf
        %v1123 = vrot.slane %v1122, 4
        %v1124 = vmax.f32 %v1122, %v1123
        %v1125 = vrot.slane %v1124, 2
        %v1126 = vmax.f32 %v1124, %v1125
        %v1127 = vrot.slane %v1126, 1
        %v1128 = vmax.f32 %v1126, %v1127
        %v1129 = vsub.f32 %v1121, %v1128
        %v1130 = vmul.f32 %v1129, 1.442695
        %v1131 = vpow.pop %v1130
        %v1132 = vsel %vm873, %v1131, 0.0
        %v1133 = vrot.slane %v1132, 4
        %v1134 = vadd.f32 %v1132, %v1133
        %v1135 = vrot.slane %v1134, 2
        %v1136 = vadd.f32 %v1134, %v1135
        %v1137 = vrot.slane %v1136, 1
        %v1138 = vadd.f32 %v1136, %v1137
        %v1139 = vrcp.pop %v1138
        %v1140 = vmul.f32 %v1131, %v1139
        %1142 = vrot.lane.b32.xlu0 %v866, 120
        %v1143 = vpop.permute.xlu0 %1142
        %v1146 = vsel %vm873, %v1140, 0
        %1148 = vmatprep.subr.mxu0 0.0
        %1149 = vmatpush1.msra.mxu0 %v1143
        %1150 = vmatprep.subr.mxu0 0.0
        %1151 = vmatpush1.msra.mxu0 0.0
        %1152 = vmatprep.subr.mxu0 0.0
        %1153 = vmatpush1.msra.mxu0 0.0
        %1154 = vmatprep.subr.mxu0 0.0
        %1155 = vmatpush1.msra.mxu0 0.0
        %1156 = vmatprep.subr.mxu0 0.0
        %1157 = vmatpush1.msra.mxu0 0.0
        %1158 = vmatprep.subr.mxu0 0.0
        %1159 = vmatpush1.msra.mxu0 0.0
        %1160 = vmatprep.subr.mxu0 0.0
        %1161 = vmatpush1.msra.mxu0 0.0
        %1162 = vmatprep.subr.mxu0 0.0
        %1163 = vmatpush1.msra.mxu0 0.0
        %1164 = vmatprep.subr.mxu0 0.0
        %1165 = vmatpush1.msra.mxu0 0.0
        %1166 = vmatprep.subr.mxu0 0.0
        %1167 = vmatpush1.msra.mxu0 0.0
        %1168 = vmatprep.subr.mxu0 0.0
        %1169 = vmatpush1.msra.mxu0 0.0
        %1170 = vmatprep.subr.mxu0 0.0
        %1171 = vmatpush1.msra.mxu0 0.0
        %1172 = vmatprep.subr.mxu0 0.0
        %1173 = vmatpush1.msra.mxu0 0.0
        %1174 = vmatprep.subr.mxu0 0.0
        %1175 = vmatpush1.msra.mxu0 0.0
        %1176 = vmatprep.subr.mxu0 0.0
        %1177 = vmatpush1.msra.mxu0 0.0
        %1178 = vmatprep.subr.mxu0 0.0
        %1179 = vmatpush1.msra.mxu0 0.0
        %1180 = vmatprep.subr.mxu0 0.0
        %1181 = vmatpush1.msra.mxu0 0.0
        %1182 = vmatprep.subr.mxu0 0.0
        %1183 = vmatpush1.msra.mxu0 0.0
        %1184 = vmatprep.subr.mxu0 0.0
        %1185 = vmatpush1.msra.mxu0 0.0
        %1186 = vmatprep.subr.mxu0 0.0
        %1187 = vmatpush1.msra.mxu0 0.0
        %1188 = vmatprep.subr.mxu0 0.0
        %1189 = vmatpush1.msra.mxu0 0.0
        %1190 = vmatprep.subr.mxu0 0.0
        %1191 = vmatpush1.msra.mxu0 0.0
        %1192 = vmatprep.subr.mxu0 0.0
        %1193 = vmatpush1.msra.mxu0 0.0
        %1194 = vmatprep.subr.mxu0 0.0
        %1195 = vmatpush1.msra.mxu0 0.0
        %1196 = vmatprep.subr.mxu0 0.0
        %1197 = vmatpush1.msra.mxu0 0.0
        %1198 = vmatprep.subr.mxu0 0.0
        %1199 = vmatpush1.msra.mxu0 0.0
        %1200 = vmatprep.subr.mxu0 0.0
        %1201 = vmatpush1.msra.mxu0 0.0
        %1202 = vmatprep.subr.mxu0 0.0
        %1203 = vmatpush1.msra.mxu0 0.0
        %1204 = vmatprep.subr.mxu0 0.0
        %1205 = vmatpush1.msra.mxu0 0.0
        %1206 = vmatprep.subr.mxu0 0.0
        %1207 = vmatpush1.msra.mxu0 0.0
        %1208 = vmatprep.subr.mxu0 0.0
        %1209 = vmatpush1.msra.mxu0 0.0
        %1210 = vmatprep.subr.mxu0 0.0
        %1211 = vmatpush1.msra.mxu0 0.0
        %1212 = vmatprep.mubr.f32.mxu0 0.0
        %1213 = vmatmul.mubr.f32.gmra.mrb[0].mxu0 %v1146
        %v1214 = vpop.f32.mrb[0].mxu0
        %v1215 = vadd.f32 0.0, %v1214
        %v1216 = vpop.f32.mrb[0].mxu0
        %1217 = vdwg.mxu0
        %v1219 = vsel %vm873, %v1215, 0
        %1221 = vmatprep.subr.mxu0 0.0
        %1222 = vmatpush1.msra.mxu0 %v870
        %1223 = vmatprep.subr.mxu0 0.0
        %1224 = vmatpush1.msra.mxu0 0.0
        %1225 = vmatprep.subr.mxu0 0.0
        %1226 = vmatpush1.msra.mxu0 0.0
        %1227 = vmatprep.subr.mxu0 0.0
        %1228 = vmatpush1.msra.mxu0 0.0
        %1229 = vmatprep.subr.mxu0 0.0
        %1230 = vmatpush1.msra.mxu0 0.0
        %1231 = vmatprep.subr.mxu0 0.0
        %1232 = vmatpush1.msra.mxu0 0.0
        %1233 = vmatprep.subr.mxu0 0.0
        %1234 = vmatpush1.msra.mxu0 0.0
        %1235 = vmatprep.subr.mxu0 0.0
        %1236 = vmatpush1.msra.mxu0 0.0
        %1237 = vmatprep.subr.mxu0 0.0
        %1238 = vmatpush1.msra.mxu0 0.0
        %1239 = vmatprep.subr.mxu0 0.0
        %1240 = vmatpush1.msra.mxu0 0.0
        %1241 = vmatprep.subr.mxu0 0.0
        %1242 = vmatpush1.msra.mxu0 0.0
        %1243 = vmatprep.subr.mxu0 0.0
        %1244 = vmatpush1.msra.mxu0 0.0
        %1245 = vmatprep.subr.mxu0 0.0
        %1246 = vmatpush1.msra.mxu0 0.0
        %1247 = vmatprep.subr.mxu0 0.0
        %1248 = vmatpush1.msra.mxu0 0.0
        %1249 = vmatprep.subr.mxu0 0.0
        %1250 = vmatpush1.msra.mxu0 0.0
        %1251 = vmatprep.subr.mxu0 0.0
        %1252 = vmatpush1.msra.mxu0 0.0
        %1253 = vmatprep.subr.mxu0 0.0
        %1254 = vmatpush1.msra.mxu0 0.0
        %1255 = vmatprep.subr.mxu0 0.0
        %1256 = vmatpush1.msra.mxu0 0.0
        %1257 = vmatprep.subr.mxu0 0.0
        %1258 = vmatpush1.msra.mxu0 0.0
        %1259 = vmatprep.subr.mxu0 0.0
        %1260 = vmatpush1.msra.mxu0 0.0
        %1261 = vmatprep.subr.mxu0 0.0
        %1262 = vmatpush1.msra.mxu0 0.0
        %1263 = vmatprep.subr.mxu0 0.0
        %1264 = vmatpush1.msra.mxu0 0.0
        %1265 = vmatprep.subr.mxu0 0.0
        %1266 = vmatpush1.msra.mxu0 0.0
        %1267 = vmatprep.subr.mxu0 0.0
        %1268 = vmatpush1.msra.mxu0 0.0
        %1269 = vmatprep.subr.mxu0 0.0
        %1270 = vmatpush1.msra.mxu0 0.0
        %1271 = vmatprep.subr.mxu0 0.0
        %1272 = vmatpush1.msra.mxu0 0.0
        %1273 = vmatprep.subr.mxu0 0.0
        %1274 = vmatpush1.msra.mxu0 0.0
        %1275 = vmatprep.subr.mxu0 0.0
        %1276 = vmatpush1.msra.mxu0 0.0
        %1277 = vmatprep.subr.mxu0 0.0
        %1278 = vmatpush1.msra.mxu0 0.0
        %1279 = vmatprep.subr.mxu0 0.0
        %1280 = vmatpush1.msra.mxu0 0.0
        %1281 = vmatprep.subr.mxu0 0.0
        %1282 = vmatpush1.msra.mxu0 0.0
        %1283 = vmatprep.subr.mxu0 0.0
        %1284 = vmatpush1.msra.mxu0 0.0
        %1285 = vmatprep.mubr.f32.mxu0 0.0
        %1286 = vmatmul.mubr.f32.gmra.mrb[0].mxu0 %v1219
        %v1287 = vpop.f32.mrb[0].mxu0
        %v1288 = vadd.f32 0.0, %v1287
        %v1289 = vpop.f32.mrb[0].mxu0
        %1290 = vdwg.mxu0
        %v1292 = vsel %vm873, %v1040, 0
        %1294 = vmatprep.subr.mxu0 0.0
        %1295 = vmatpush1.msra.mxu0 %v869
        %1296 = vmatprep.subr.mxu0 0.0
        %1297 = vmatpush1.msra.mxu0 0.0
        %1298 = vmatprep.subr.mxu0 0.0
        %1299 = vmatpush1.msra.mxu0 0.0
        %1300 = vmatprep.subr.mxu0 0.0
        %1301 = vmatpush1.msra.mxu0 0.0
        %1302 = vmatprep.subr.mxu0 0.0
        %1303 = vmatpush1.msra.mxu0 0.0
        %1304 = vmatprep.subr.mxu0 0.0
        %1305 = vmatpush1.msra.mxu0 0.0
        %1306 = vmatprep.subr.mxu0 0.0
        %1307 = vmatpush1.msra.mxu0 0.0
        %1308 = vmatprep.subr.mxu0 0.0
        %1309 = vmatpush1.msra.mxu0 0.0
        %1310 = vmatprep.subr.mxu0 0.0
        %1311 = vmatpush1.msra.mxu0 0.0
        %1312 = vmatprep.subr.mxu0 0.0
        %1313 = vmatpush1.msra.mxu0 0.0
        %1314 = vmatprep.subr.mxu0 0.0
        %1315 = vmatpush1.msra.mxu0 0.0
        %1316 = vmatprep.subr.mxu0 0.0
        %1317 = vmatpush1.msra.mxu0 0.0
        %1318 = vmatprep.subr.mxu0 0.0
        %1319 = vmatpush1.msra.mxu0 0.0
        %1320 = vmatprep.subr.mxu0 0.0
        %1321 = vmatpush1.msra.mxu0 0.0
        %1322 = vmatprep.subr.mxu0 0.0
        %1323 = vmatpush1.msra.mxu0 0.0
        %1324 = vmatprep.subr.mxu0 0.0
        %1325 = vmatpush1.msra.mxu0 0.0
        %1326 = vmatprep.subr.mxu0 0.0
        %1327 = vmatpush1.msra.mxu0 0.0
        %1328 = vmatprep.subr.mxu0 0.0
        %1329 = vmatpush1.msra.mxu0 0.0
        %1330 = vmatprep.subr.mxu0 0.0
        %1331 = vmatpush1.msra.mxu0 0.0
        %1332 = vmatprep.subr.mxu0 0.0
        %1333 = vmatpush1.msra.mxu0 0.0
        %1334 = vmatprep.subr.mxu0 0.0
        %1335 = vmatpush1.msra.mxu0 0.0
        %1336 = vmatprep.subr.mxu0 0.0
        %1337 = vmatpush1.msra.mxu0 0.0
        %1338 = vmatprep.subr.mxu0 0.0
        %1339 = vmatpush1.msra.mxu0 0.0
        %1340 = vmatprep.subr.mxu0 0.0
        %1341 = vmatpush1.msra.mxu0 0.0
        %1342 = vmatprep.subr.mxu0 0.0
        %1343 = vmatpush1.msra.mxu0 0.0
        %1344 = vmatprep.subr.mxu0 0.0
        %1345 = vmatpush1.msra.mxu0 0.0
        %1346 = vmatprep.subr.mxu0 0.0
        %1347 = vmatpush1.msra.mxu0 0.0
        %1348 = vmatprep.subr.mxu0 0.0
        %1349 = vmatpush1.msra.mxu0 0.0
        %1350 = vmatprep.subr.mxu0 0.0
        %1351 = vmatpush1.msra.mxu0 0.0
        %1352 = vmatprep.subr.mxu0 0.0
        %1353 = vmatpush1.msra.mxu0 0.0
        %1354 = vmatprep.subr.mxu0 0.0
        %1355 = vmatpush1.msra.mxu0 0.0
        %1356 = vmatprep.subr.mxu0 0.0
        %1357 = vmatpush1.msra.mxu0 0.0
        %1358 = vmatprep.mubr.f32.mxu0 0.0
        %1359 = vmatmul.mubr.f32.gmra.mrb[0].mxu0 %v1292
        %v1360 = vpop.f32.mrb[0].mxu0
        %v1361 = vadd.f32 %v1288, %v1360
        %v1362 = vpop.f32.mrb[0].mxu0
        %1363 = vdwg.mxu0
        %1364 = vrot.lane.b32.xlu0 %v704, 112
        %v1365 = vpop.permute.xlu0 %1364
        %1366 = vrot.lane.b32.xlu0 %v785, 112
        %v1367 = vpop.permute.xlu0 %1366
        %v1368 = vsel %vm873, %v1365, 0
        %v1370 = vsel %vm873, %v1367, 0
        %1372 = vmatprep.subr.mxu0 0.0
        %1373 = vmatpush1.xpose.msra.mxu0 %v1370
        %1374 = vmatprep.subr.mxu0 0.0
        %1375 = vmatpush1.xpose.msra.mxu0 0.0
        %1376 = vmatprep.subr.mxu0 0.0
        %1377 = vmatpush1.xpose.msra.mxu0 0.0
        %1378 = vmatprep.subr.mxu0 0.0
        %1379 = vmatpush1.xpose.msra.mxu0 0.0
        %1380 = vmatprep.subr.mxu0 0.0
        %1381 = vmatpush1.xpose.msra.mxu0 0.0
        %1382 = vmatprep.subr.mxu0 0.0
        %1383 = vmatpush1.xpose.msra.mxu0 0.0
        %1384 = vmatprep.subr.mxu0 0.0
        %1385 = vmatpush1.xpose.msra.mxu0 0.0
        %1386 = vmatprep.subr.mxu0 0.0
        %1387 = vmatpush1.xpose.msra.mxu0 0.0
        %1388 = vmatprep.subr.mxu0 0.0
        %1389 = vmatpush1.xpose.msra.mxu0 0.0
        %1390 = vmatprep.subr.mxu0 0.0
        %1391 = vmatpush1.xpose.msra.mxu0 0.0
        %1392 = vmatprep.subr.mxu0 0.0
        %1393 = vmatpush1.xpose.msra.mxu0 0.0
        %1394 = vmatprep.subr.mxu0 0.0
        %1395 = vmatpush1.xpose.msra.mxu0 0.0
        %1396 = vmatprep.subr.mxu0 0.0
        %1397 = vmatpush1.xpose.msra.mxu0 0.0
        %1398 = vmatprep.subr.mxu0 0.0
        %1399 = vmatpush1.xpose.msra.mxu0 0.0
        %1400 = vmatprep.subr.mxu0 0.0
        %1401 = vmatpush1.xpose.msra.mxu0 0.0
        %1402 = vmatprep.subr.mxu0 0.0
        %1403 = vmatpush1.xpose.msra.mxu0 0.0
        %1404 = vmatprep.subr.mxu0 0.0
        %1405 = vmatpush1.xpose.msra.mxu0 0.0
        %1406 = vmatprep.subr.mxu0 0.0
        %1407 = vmatpush1.xpose.msra.mxu0 0.0
        %1408 = vmatprep.subr.mxu0 0.0
        %1409 = vmatpush1.xpose.msra.mxu0 0.0
        %1410 = vmatprep.subr.mxu0 0.0
        %1411 = vmatpush1.xpose.msra.mxu0 0.0
        %1412 = vmatprep.subr.mxu0 0.0
        %1413 = vmatpush1.xpose.msra.mxu0 0.0
        %1414 = vmatprep.subr.mxu0 0.0
        %1415 = vmatpush1.xpose.msra.mxu0 0.0
        %1416 = vmatprep.subr.mxu0 0.0
        %1417 = vmatpush1.xpose.msra.mxu0 0.0
        %1418 = vmatprep.subr.mxu0 0.0
        %1419 = vmatpush1.xpose.msra.mxu0 0.0
        %1420 = vmatprep.subr.mxu0 0.0
        %1421 = vmatpush1.xpose.msra.mxu0 0.0
        %1422 = vmatprep.subr.mxu0 0.0
        %1423 = vmatpush1.xpose.msra.mxu0 0.0
        %1424 = vmatprep.subr.mxu0 0.0
        %1425 = vmatpush1.xpose.msra.mxu0 0.0
        %1426 = vmatprep.subr.mxu0 0.0
        %1427 = vmatpush1.xpose.msra.mxu0 0.0
        %1428 = vmatprep.subr.mxu0 0.0
        %1429 = vmatpush1.xpose.msra.mxu0 0.0
        %1430 = vmatprep.subr.mxu0 0.0
        %1431 = vmatpush1.xpose.msra.mxu0 0.0
        %1432 = vmatprep.subr.mxu0 0.0
        %1433 = vmatpush1.xpose.msra.mxu0 0.0
        %1434 = vmatprep.subr.mxu0 0.0
        %1435 = vmatpush1.xpose.msra.mxu0 0.0
        %1436 = vmatprep.mubr.f32.mxu0 0.0
        %1437 = vmatmul.mubr.f32.gmra.mrb[0].mxu0 %v1368
        %v1438 = vpop.f32.mrb[0].mxu0
        %v1439 = vadd.f32 0.0, %v1438
        %v1440 = vpop.f32.mrb[0].mxu0
        %1441 = vdwg.mxu0
        %v1442 = vmul.f32 %v1439, 0.35355338
        %v1443 = vsel %vm873, %v1442, -inf
        %v1444 = vrot.slane %v1443, 4
        %v1445 = vmax.f32 %v1443, %v1444
        %v1446 = vrot.slane %v1445, 2
        %v1447 = vmax.f32 %v1445, %v1446
        %v1448 = vrot.slane %v1447, 1
        %v1449 = vmax.f32 %v1447, %v1448
        %v1450 = vsub.f32 %v1442, %v1449
        %v1451 = vmul.f32 %v1450, 1.442695
        %v1452 = vpow.pop %v1451
        %v1453 = vsel %vm873, %v1452, 0.0
        %v1454 = vrot.slane %v1453, 4
        %v1455 = vadd.f32 %v1453, %v1454
        %v1456 = vrot.slane %v1455, 2
        %v1457 = vadd.f32 %v1455, %v1456
        %v1458 = vrot.slane %v1457, 1
        %v1459 = vadd.f32 %v1457, %v1458
        %v1460 = vrcp.pop %v1459
        %v1461 = vmul.f32 %v1452, %v1460
        %1462 = vrot.lane.b32.xlu0 %v866, 112
        %v1463 = vpop.permute.xlu0 %1462
        %v1466 = vsel %vm873, %v1461, 0
        %1468 = vmatprep.subr.mxu0 0.0
        %1469 = vmatpush1.msra.mxu0 %v1463
        %1470 = vmatprep.subr.mxu0 0.0
        %1471 = vmatpush1.msra.mxu0 0.0
        %1472 = vmatprep.subr.mxu0 0.0
        %1473 = vmatpush1.msra.mxu0 0.0
        %1474 = vmatprep.subr.mxu0 0.0
        %1475 = vmatpush1.msra.mxu0 0.0
        %1476 = vmatprep.subr.mxu0 0.0
        %1477 = vmatpush1.msra.mxu0 0.0
        %1478 = vmatprep.subr.mxu0 0.0
        %1479 = vmatpush1.msra.mxu0 0.0
        %1480 = vmatprep.subr.mxu0 0.0
        %1481 = vmatpush1.msra.mxu0 0.0
        %1482 = vmatprep.subr.mxu0 0.0
        %1483 = vmatpush1.msra.mxu0 0.0
        %1484 = vmatprep.subr.mxu0 0.0
        %1485 = vmatpush1.msra.mxu0 0.0
        %1486 = vmatprep.subr.mxu0 0.0
        %1487 = vmatpush1.msra.mxu0 0.0
        %1488 = vmatprep.subr.mxu0 0.0
        %1489 = vmatpush1.msra.mxu0 0.0
        %1490 = vmatprep.subr.mxu0 0.0
        %1491 = vmatpush1.msra.mxu0 0.0
        %1492 = vmatprep.subr.mxu0 0.0
        %1493 = vmatpush1.msra.mxu0 0.0
        %1494 = vmatprep.subr.mxu0 0.0
        %1495 = vmatpush1.msra.mxu0 0.0
        %1496 = vmatprep.subr.mxu0 0.0
        %1497 = vmatpush1.msra.mxu0 0.0
        %1498 = vmatprep.subr.mxu0 0.0
        %1499 = vmatpush1.msra.mxu0 0.0
        %1500 = vmatprep.subr.mxu0 0.0
        %1501 = vmatpush1.msra.mxu0 0.0
        %1502 = vmatprep.subr.mxu0 0.0
        %1503 = vmatpush1.msra.mxu0 0.0
        %1504 = vmatprep.subr.mxu0 0.0
        %1505 = vmatpush1.msra.mxu0 0.0
        %1506 = vmatprep.subr.mxu0 0.0
        %1507 = vmatpush1.msra.mxu0 0.0
        %1508 = vmatprep.subr.mxu0 0.0
        %1509 = vmatpush1.msra.mxu0 0.0
        %1510 = vmatprep.subr.mxu0 0.0
        %1511 = vmatpush1.msra.mxu0 0.0
        %1512 = vmatprep.subr.mxu0 0.0
        %1513 = vmatpush1.msra.mxu0 0.0
        %1514 = vmatprep.subr.mxu0 0.0
        %1515 = vmatpush1.msra.mxu0 0.0
        %1516 = vmatprep.subr.mxu0 0.0
        %1517 = vmatpush1.msra.mxu0 0.0
        %1518 = vmatprep.subr.mxu0 0.0
        %1519 = vmatpush1.msra.mxu0 0.0
        %1520 = vmatprep.subr.mxu0 0.0
        %1521 = vmatpush1.msra.mxu0 0.0
        %1522 = vmatprep.subr.mxu0 0.0
        %1523 = vmatpush1.msra.mxu0 0.0
        %1524 = vmatprep.subr.mxu0 0.0
        %1525 = vmatpush1.msra.mxu0 0.0
        %1526 = vmatprep.subr.mxu0 0.0
        %1527 = vmatpush1.msra.mxu0 0.0
        %1528 = vmatprep.subr.mxu0 0.0
        %1529 = vmatpush1.msra.mxu0 0.0
        %1530 = vmatprep.subr.mxu0 0.0
        %1531 = vmatpush1.msra.mxu0 0.0
        %1532 = vmatprep.mubr.f32.mxu0 0.0
        %1533 = vmatmul.mubr.f32.gmra.mrb[0].mxu0 %v1466
        %v1534 = vpop.f32.mrb[0].mxu0
        %v1535 = vadd.f32 0.0, %v1534
        %v1536 = vpop.f32.mrb[0].mxu0
        %1537 = vdwg.mxu0
        %v1539 = vsel %vm873, %v1535, 0
        %1541 = vmatprep.subr.mxu0 0.0
        %1542 = vmatpush1.msra.mxu0 %v871
        %1543 = vmatprep.subr.mxu0 0.0
        %1544 = vmatpush1.msra.mxu0 0.0
        %1545 = vmatprep.subr.mxu0 0.0
        %1546 = vmatpush1.msra.mxu0 0.0
        %1547 = vmatprep.subr.mxu0 0.0
        %1548 = vmatpush1.msra.mxu0 0.0
        %1549 = vmatprep.subr.mxu0 0.0
        %1550 = vmatpush1.msra.mxu0 0.0
        %1551 = vmatprep.subr.mxu0 0.0
        %1552 = vmatpush1.msra.mxu0 0.0
        %1553 = vmatprep.subr.mxu0 0.0
        %1554 = vmatpush1.msra.mxu0 0.0
        %1555 = vmatprep.subr.mxu0 0.0
        %1556 = vmatpush1.msra.mxu0 0.0
        %1557 = vmatprep.subr.mxu0 0.0
        %1558 = vmatpush1.msra.mxu0 0.0
        %1559 = vmatprep.subr.mxu0 0.0
        %1560 = vmatpush1.msra.mxu0 0.0
        %1561 = vmatprep.subr.mxu0 0.0
        %1562 = vmatpush1.msra.mxu0 0.0
        %1563 = vmatprep.subr.mxu0 0.0
        %1564 = vmatpush1.msra.mxu0 0.0
        %1565 = vmatprep.subr.mxu0 0.0
        %1566 = vmatpush1.msra.mxu0 0.0
        %1567 = vmatprep.subr.mxu0 0.0
        %1568 = vmatpush1.msra.mxu0 0.0
        %1569 = vmatprep.subr.mxu0 0.0
        %1570 = vmatpush1.msra.mxu0 0.0
        %1571 = vmatprep.subr.mxu0 0.0
        %1572 = vmatpush1.msra.mxu0 0.0
        %1573 = vmatprep.subr.mxu0 0.0
        %1574 = vmatpush1.msra.mxu0 0.0
        %1575 = vmatprep.subr.mxu0 0.0
        %1576 = vmatpush1.msra.mxu0 0.0
        %1577 = vmatprep.subr.mxu0 0.0
        %1578 = vmatpush1.msra.mxu0 0.0
        %1579 = vmatprep.subr.mxu0 0.0
        %1580 = vmatpush1.msra.mxu0 0.0
        %1581 = vmatprep.subr.mxu0 0.0
        %1582 = vmatpush1.msra.mxu0 0.0
        %1583 = vmatprep.subr.mxu0 0.0
        %1584 = vmatpush1.msra.mxu0 0.0
        %1585 = vmatprep.subr.mxu0 0.0
        %1586 = vmatpush1.msra.mxu0 0.0
        %1587 = vmatprep.subr.mxu0 0.0
        %1588 = vmatpush1.msra.mxu0 0.0
        %1589 = vmatprep.subr.mxu0 0.0
        %1590 = vmatpush1.msra.mxu0 0.0
        %1591 = vmatprep.subr.mxu0 0.0
        %1592 = vmatpush1.msra.mxu0 0.0
        %1593 = vmatprep.subr.mxu0 0.0
        %1594 = vmatpush1.msra.mxu0 0.0
        %1595 = vmatprep.subr.mxu0 0.0
        %1596 = vmatpush1.msra.mxu0 0.0
        %1597 = vmatprep.subr.mxu0 0.0
        %1598 = vmatpush1.msra.mxu0 0.0
        %1599 = vmatprep.subr.mxu0 0.0
        %1600 = vmatpush1.msra.mxu0 0.0
        %1601 = vmatprep.subr.mxu0 0.0
        %1602 = vmatpush1.msra.mxu0 0.0
        %1603 = vmatprep.subr.mxu0 0.0
        %1604 = vmatpush1.msra.mxu0 0.0
        %1605 = vmatprep.mubr.f32.mxu0 0.0
        %1606 = vmatmul.mubr.f32.gmra.mrb[0].mxu0 %v1539
        %v1607 = vpop.f32.mrb[0].mxu0
        %v1608 = vadd.f32 0.0, %v1607
        %v1609 = vpop.f32.mrb[0].mxu0
        %1610 = vdwg.mxu0
        %v1611 = vadd.f32 %v1361, %v1608
        %1612 = vrot.lane.b32.xlu0 %v704, 104
        %v1613 = vpop.permute.xlu0 %1612
        %1614 = vrot.lane.b32.xlu0 %v785, 104
        %v1615 = vpop.permute.xlu0 %1614
        %v1616 = vsel %vm873, %v1613, 0
        %v1618 = vsel %vm873, %v1615, 0
        %1620 = vmatprep.subr.mxu0 0.0
        %1621 = vmatpush1.xpose.msra.mxu0 %v1618
        %1622 = vmatprep.subr.mxu0 0.0
        %1623 = vmatpush1.xpose.msra.mxu0 0.0
        %1624 = vmatprep.subr.mxu0 0.0
        %1625 = vmatpush1.xpose.msra.mxu0 0.0
        %1626 = vmatprep.subr.mxu0 0.0
        %1627 = vmatpush1.xpose.msra.mxu0 0.0
        %1628 = vmatprep.subr.mxu0 0.0
        %1629 = vmatpush1.xpose.msra.mxu0 0.0
        %1630 = vmatprep.subr.mxu0 0.0
        %1631 = vmatpush1.xpose.msra.mxu0 0.0
        %1632 = vmatprep.subr.mxu0 0.0
        %1633 = vmatpush1.xpose.msra.mxu0 0.0
        %1634 = vmatprep.subr.mxu0 0.0
        %1635 = vmatpush1.xpose.msra.mxu0 0.0
        %1636 = vmatprep.subr.mxu0 0.0
        %1637 = vmatpush1.xpose.msra.mxu0 0.0
        %1638 = vmatprep.subr.mxu0 0.0
        %1639 = vmatpush1.xpose.msra.mxu0 0.0
        %1640 = vmatprep.subr.mxu0 0.0
        %1641 = vmatpush1.xpose.msra.mxu0 0.0
        %1642 = vmatprep.subr.mxu0 0.0
        %1643 = vmatpush1.xpose.msra.mxu0 0.0
        %1644 = vmatprep.subr.mxu0 0.0
        %1645 = vmatpush1.xpose.msra.mxu0 0.0
        %1646 = vmatprep.subr.mxu0 0.0
        %1647 = vmatpush1.xpose.msra.mxu0 0.0
        %1648 = vmatprep.subr.mxu0 0.0
        %1649 = vmatpush1.xpose.msra.mxu0 0.0
        %1650 = vmatprep.subr.mxu0 0.0
        %1651 = vmatpush1.xpose.msra.mxu0 0.0
        %1652 = vmatprep.subr.mxu0 0.0
        %1653 = vmatpush1.xpose.msra.mxu0 0.0
        %1654 = vmatprep.subr.mxu0 0.0
        %1655 = vmatpush1.xpose.msra.mxu0 0.0
        %1656 = vmatprep.subr.mxu0 0.0
        %1657 = vmatpush1.xpose.msra.mxu0 0.0
        %1658 = vmatprep.subr.mxu0 0.0
        %1659 = vmatpush1.xpose.msra.mxu0 0.0
        %1660 = vmatprep.subr.mxu0 0.0
        %1661 = vmatpush1.xpose.msra.mxu0 0.0
        %1662 = vmatprep.subr.mxu0 0.0
        %1663 = vmatpush1.xpose.msra.mxu0 0.0
        %1664 = vmatprep.subr.mxu0 0.0
        %1665 = vmatpush1.xpose.msra.mxu0 0.0
        %1666 = vmatprep.subr.mxu0 0.0
        %1667 = vmatpush1.xpose.msra.mxu0 0.0
        %1668 = vmatprep.subr.mxu0 0.0
        %1669 = vmatpush1.xpose.msra.mxu0 0.0
        %1670 = vmatprep.subr.mxu0 0.0
        %1671 = vmatpush1.xpose.msra.mxu0 0.0
        %1672 = vmatprep.subr.mxu0 0.0
        %1673 = vmatpush1.xpose.msra.mxu0 0.0
        %1674 = vmatprep.subr.mxu0 0.0
        %1675 = vmatpush1.xpose.msra.mxu0 0.0
        %1676 = vmatprep.subr.mxu0 0.0
        %1677 = vmatpush1.xpose.msra.mxu0 0.0
        %1678 = vmatprep.subr.mxu0 0.0
        %1679 = vmatpush1.xpose.msra.mxu0 0.0
        %1680 = vmatprep.subr.mxu0 0.0
        %1681 = vmatpush1.xpose.msra.mxu0 0.0
        %1682 = vmatprep.subr.mxu0 0.0
        %1683 = vmatpush1.xpose.msra.mxu0 0.0
        %1684 = vmatprep.mubr.f32.mxu0 0.0
        %1685 = vmatmul.mubr.f32.gmra.mrb[0].mxu0 %v1616
        %v1686 = vpop.f32.mrb[0].mxu0
        %v1687 = vadd.f32 0.0, %v1686
        %v1688 = vpop.f32.mrb[0].mxu0
        %1689 = vdwg.mxu0
        %v1690 = vmul.f32 %v1687, 0.35355338
        %v1691 = vsel %vm873, %v1690, -inf
        %v1692 = vrot.slane %v1691, 4
        %v1693 = vmax.f32 %v1691, %v1692
        %v1694 = vrot.slane %v1693, 2
        %v1695 = vmax.f32 %v1693, %v1694
        %v1696 = vrot.slane %v1695, 1
        %v1697 = vmax.f32 %v1695, %v1696
        %v1698 = vsub.f32 %v1690, %v1697
        %v1699 = vmul.f32 %v1698, 1.442695
        %v1700 = vpow.pop %v1699
        %v1701 = vsel %vm873, %v1700, 0.0
        %v1702 = vrot.slane %v1701, 4
        %v1703 = vadd.f32 %v1701, %v1702
        %v1704 = vrot.slane %v1703, 2
        %v1705 = vadd.f32 %v1703, %v1704
        %v1706 = vrot.slane %v1705, 1
        %v1707 = vadd.f32 %v1705, %v1706
        %v1708 = vrcp.pop %v1707
        %v1709 = vmul.f32 %v1700, %v1708
        %1710 = vrot.lane.b32.xlu0 %v866, 104
        %v1711 = vpop.permute.xlu0 %1710
        %v1714 = vsel %vm873, %v1709, 0
        %1716 = vmatprep.subr.mxu0 0.0
        %1717 = vmatpush1.msra.mxu0 %v1711
        %1718 = vmatprep.subr.mxu0 0.0
        %1719 = vmatpush1.msra.mxu0 0.0
        %1720 = vmatprep.subr.mxu0 0.0
        %1721 = vmatpush1.msra.mxu0 0.0
        %1722 = vmatprep.subr.mxu0 0.0
        %1723 = vmatpush1.msra.mxu0 0.0
        %1724 = vmatprep.subr.mxu0 0.0
        %1725 = vmatpush1.msra.mxu0 0.0
        %1726 = vmatprep.subr.mxu0 0.0
        %1727 = vmatpush1.msra.mxu0 0.0
        %1728 = vmatprep.subr.mxu0 0.0
        %1729 = vmatpush1.msra.mxu0 0.0
        %1730 = vmatprep.subr.mxu0 0.0
        %1731 = vmatpush1.msra.mxu0 0.0
        %1732 = vmatprep.subr.mxu0 0.0
        %1733 = vmatpush1.msra.mxu0 0.0
        %1734 = vmatprep.subr.mxu0 0.0
        %1735 = vmatpush1.msra.mxu0 0.0
        %1736 = vmatprep.subr.mxu0 0.0
        %1737 = vmatpush1.msra.mxu0 0.0
        %1738 = vmatprep.subr.mxu0 0.0
        %1739 = vmatpush1.msra.mxu0 0.0
        %1740 = vmatprep.subr.mxu0 0.0
        %1741 = vmatpush1.msra.mxu0 0.0
        %1742 = vmatprep.subr.mxu0 0.0
        %1743 = vmatpush1.msra.mxu0 0.0
        %1744 = vmatprep.subr.mxu0 0.0
        %1745 = vmatpush1.msra.mxu0 0.0
        %1746 = vmatprep.subr.mxu0 0.0
        %1747 = vmatpush1.msra.mxu0 0.0
        %1748 = vmatprep.subr.mxu0 0.0
        %1749 = vmatpush1.msra.mxu0 0.0
        %1750 = vmatprep.subr.mxu0 0.0
        %1751 = vmatpush1.msra.mxu0 0.0
        %1752 = vmatprep.subr.mxu0 0.0
        %1753 = vmatpush1.msra.mxu0 0.0
        %1754 = vmatprep.subr.mxu0 0.0
        %1755 = vmatpush1.msra.mxu0 0.0
        %1756 = vmatprep.subr.mxu0 0.0
        %1757 = vmatpush1.msra.mxu0 0.0
        %1758 = vmatprep.subr.mxu0 0.0
        %1759 = vmatpush1.msra.mxu0 0.0
        %1760 = vmatprep.subr.mxu0 0.0
        %1761 = vmatpush1.msra.mxu0 0.0
        %1762 = vmatprep.subr.mxu0 0.0
        %1763 = vmatpush1.msra.mxu0 0.0
        %1764 = vmatprep.subr.mxu0 0.0
        %1765 = vmatpush1.msra.mxu0 0.0
        %1766 = vmatprep.subr.mxu0 0.0
        %1767 = vmatpush1.msra.mxu0 0.0
        %1768 = vmatprep.subr.mxu0 0.0
        %1769 = vmatpush1.msra.mxu0 0.0
        %1770 = vmatprep.subr.mxu0 0.0
        %1771 = vmatpush1.msra.mxu0 0.0
        %1772 = vmatprep.subr.mxu0 0.0
        %1773 = vmatpush1.msra.mxu0 0.0
        %1774 = vmatprep.subr.mxu0 0.0
        %1775 = vmatpush1.msra.mxu0 0.0
        %1776 = vmatprep.subr.mxu0 0.0
        %1777 = vmatpush1.msra.mxu0 0.0
        %1778 = vmatprep.subr.mxu0 0.0
        %1779 = vmatpush1.msra.mxu0 0.0
        %1780 = vmatprep.mubr.f32.mxu0 0.0
        %1781 = vmatmul.mubr.f32.gmra.mrb[0].mxu0 %v1714
        %v1782 = vpop.f32.mrb[0].mxu0
        %v1783 = vadd.f32 0.0, %v1782
        %v1784 = vpop.f32.mrb[0].mxu0
        %1785 = vdwg.mxu0
        %v1787 = vsel %vm873, %v1783, 0
        %1789 = vmatprep.subr.mxu0 0.0
        %1790 = vmatpush1.msra.mxu0 %v872
        %1791 = vmatprep.subr.mxu0 0.0
        %1792 = vmatpush1.msra.mxu0 0.0
        %1793 = vmatprep.subr.mxu0 0.0
        %1794 = vmatpush1.msra.mxu0 0.0
        %1795 = vmatprep.subr.mxu0 0.0
        %1796 = vmatpush1.msra.mxu0 0.0
        %1797 = vmatprep.subr.mxu0 0.0
        %1798 = vmatpush1.msra.mxu0 0.0
        %1799 = vmatprep.subr.mxu0 0.0
        %1800 = vmatpush1.msra.mxu0 0.0
        %1801 = vmatprep.subr.mxu0 0.0
        %1802 = vmatpush1.msra.mxu0 0.0
        %1803 = vmatprep.subr.mxu0 0.0
        %1804 = vmatpush1.msra.mxu0 0.0
        %1805 = vmatprep.subr.mxu0 0.0
        %1806 = vmatpush1.msra.mxu0 0.0
        %1807 = vmatprep.subr.mxu0 0.0
        %1808 = vmatpush1.msra.mxu0 0.0
        %1809 = vmatprep.subr.mxu0 0.0
        %1810 = vmatpush1.msra.mxu0 0.0
        %1811 = vmatprep.subr.mxu0 0.0
        %1812 = vmatpush1.msra.mxu0 0.0
        %1813 = vmatprep.subr.mxu0 0.0
        %1814 = vmatpush1.msra.mxu0 0.0
        %1815 = vmatprep.subr.mxu0 0.0
        %1816 = vmatpush1.msra.mxu0 0.0
        %1817 = vmatprep.subr.mxu0 0.0
        %1818 = vmatpush1.msra.mxu0 0.0
        %1819 = vmatprep.subr.mxu0 0.0
        %1820 = vmatpush1.msra.mxu0 0.0
        %1821 = vmatprep.subr.mxu0 0.0
        %1822 = vmatpush1.msra.mxu0 0.0
        %1823 = vmatprep.subr.mxu0 0.0
        %1824 = vmatpush1.msra.mxu0 0.0
        %1825 = vmatprep.subr.mxu0 0.0
        %1826 = vmatpush1.msra.mxu0 0.0
        %1827 = vmatprep.subr.mxu0 0.0
        %1828 = vmatpush1.msra.mxu0 0.0
        %1829 = vmatprep.subr.mxu0 0.0
        %1830 = vmatpush1.msra.mxu0 0.0
        %1831 = vmatprep.subr.mxu0 0.0
        %1832 = vmatpush1.msra.mxu0 0.0
        %1833 = vmatprep.subr.mxu0 0.0
        %1834 = vmatpush1.msra.mxu0 0.0
        %1835 = vmatprep.subr.mxu0 0.0
        %1836 = vmatpush1.msra.mxu0 0.0
        %1837 = vmatprep.subr.mxu0 0.0
        %1838 = vmatpush1.msra.mxu0 0.0
        %1839 = vmatprep.subr.mxu0 0.0
        %1840 = vmatpush1.msra.mxu0 0.0
        %1841 = vmatprep.subr.mxu0 0.0
        %1842 = vmatpush1.msra.mxu0 0.0
        %1843 = vmatprep.subr.mxu0 0.0
        %1844 = vmatpush1.msra.mxu0 0.0
        %1845 = vmatprep.subr.mxu0 0.0
        %1846 = vmatpush1.msra.mxu0 0.0
        %1847 = vmatprep.subr.mxu0 0.0
        %1848 = vmatpush1.msra.mxu0 0.0
        %1849 = vmatprep.subr.mxu0 0.0
        %1850 = vmatpush1.msra.mxu0 0.0
        %1851 = vmatprep.subr.mxu0 0.0
        %1852 = vmatpush1.msra.mxu0 0.0
        %1853 = vmatprep.mubr.f32.mxu0 0.0
        %1854 = vmatmul.mubr.f32.gmra.mrb[0].mxu0 %v1787
        %v1855 = vpop.f32.mrb[0].mxu0
        %v1856 = vadd.f32 0.0, %v1855
        %v1857 = vpop.f32.mrb[0].mxu0
        %1858 = vdwg.mxu0
        %v1859 = vadd.f32 %v1611, %v1856
        %v1860 = vadd.f32 %v591, %v1859
        %v1861 = vsel %vm592, %v1860, 0.0
        %1862 = vadd.xlane.f32.xlu0 %v1861
        %v1863 = vpop.xlane.xlu0 %1862
        %v1864 = vmul.f32 %v1863, %v596
        %v1865 = vsub.f32 %v1860, %v1864
        %v1866 = vmul.f32 %v1865, %v1865
        %v1867 = vsel %vm592, %v1866, 0.0
        %1868 = vadd.xlane.f32.xlu0 %v1867
        %v1869 = vpop.xlane.xlu0 %1868
        %v1870 = vmul.f32 %v1869, %v596
        %v1871 = vadd.f32 %v1870, 1e-05
        %v1872 = vrsqrt.pop %v1871
        %v1873 = vmul.f32 %v1865, %v1872
        %v1874 = vld [vmem:[%s10] sm:$0x1]
        %v1876 = vlaneseq
        %v1877 = vshrl.u32 %v1876, 7
        %v1878 = vsub.s32 0, %v1877
        %v1879 = vrot.slane %v1874, %v1878
        %v1881 = vmul.f32 %v1873, %v1879
        %v1882 = vld [vmem:[%s11] sm:$0x1]
        %v1884 = vlaneseq
        %v1885 = vshrl.u32 %v1884, 7
        %v1886 = vsub.s32 0, %v1885
        %v1887 = vrot.slane %v1882, %v1886
        %v1889 = vadd.f32 %v1881, %v1887
        %v1890 = vld [vmem:[#allocation7] sm:$0xff]
        %v1891 = vld [vmem:[#allocation7 + $0x8] sm:$0xff]
        %v1892 = vld [vmem:[#allocation7 + $0x10] sm:$0xff]
        %v1893 = vld [vmem:[#allocation7 + $0x18] sm:$0xff]
        %v1894 = vld [vmem:[#allocation8] sm:$0x1]
        %v1896 = vlaneseq
        %v1897 = vshrl.u32 %v1896, 7
        %v1898 = vsub.s32 0, %v1897
        %v1899 = vrot.slane %v1894, %v1898
        %v1902 = vsel %vm592, %v1889, 0
        %1904 = vmatprep.subr.mxu0 0.0
        %1905 = vmatpush1.msra.mxu0 %v1890
        %1906 = vmatprep.subr.mxu0 0.0
        %1907 = vmatpush1.msra.mxu0 %v1891
        %1908 = vmatprep.subr.mxu0 0.0
        %1909 = vmatpush1.msra.mxu0 %v1892
        %1910 = vmatprep.subr.mxu0 0.0
        %1911 = vmatpush1.msra.mxu0 %v1893
        %1912 = vmatprep.subr.mxu0 0.0
        %1913 = vmatpush1.msra.mxu0 0.0
        %1914 = vmatprep.subr.mxu0 0.0
        %1915 = vmatpush1.msra.mxu0 0.0
        %1916 = vmatprep.subr.mxu0 0.0
        %1917 = vmatpush1.msra.mxu0 0.0
        %1918 = vmatprep.subr.mxu0 0.0
        %1919 = vmatpush1.msra.mxu0 0.0
        %1920 = vmatprep.subr.mxu0 0.0
        %1921 = vmatpush1.msra.mxu0 0.0
        %1922 = vmatprep.subr.mxu0 0.0
        %1923 = vmatpush1.msra.mxu0 0.0
        %1924 = vmatprep.subr.mxu0 0.0
        %1925 = vmatpush1.msra.mxu0 0.0
        %1926 = vmatprep.subr.mxu0 0.0
        %1927 = vmatpush1.msra.mxu0 0.0
        %1928 = vmatprep.subr.mxu0 0.0
        %1929 = vmatpush1.msra.mxu0 0.0
        %1930 = vmatprep.subr.mxu0 0.0
        %1931 = vmatpush1.msra.mxu0 0.0
        %1932 = vmatprep.subr.mxu0 0.0
        %1933 = vmatpush1.msra.mxu0 0.0
        %1934 = vmatprep.subr.mxu0 0.0
        %1935 = vmatpush1.msra.mxu0 0.0
        %1936 = vmatprep.subr.mxu0 0.0
        %1937 = vmatpush1.msra.mxu0 0.0
        %1938 = vmatprep.subr.mxu0 0.0
        %1939 = vmatpush1.msra.mxu0 0.0
        %1940 = vmatprep.subr.mxu0 0.0
        %1941 = vmatpush1.msra.mxu0 0.0
        %1942 = vmatprep.subr.mxu0 0.0
        %1943 = vmatpush1.msra.mxu0 0.0
        %1944 = vmatprep.subr.mxu0 0.0
        %1945 = vmatpush1.msra.mxu0 0.0
        %1946 = vmatprep.subr.mxu0 0.0
        %1947 = vmatpush1.msra.mxu0 0.0
        %1948 = vmatprep.subr.mxu0 0.0
        %1949 = vmatpush1.msra.mxu0 0.0
        %1950 = vmatprep.subr.mxu0 0.0
        %1951 = vmatpush1.msra.mxu0 0.0
        %1952 = vmatprep.subr.mxu0 0.0
        %1953 = vmatpush1.msra.mxu0 0.0
        %1954 = vmatprep.subr.mxu0 0.0
        %1955 = vmatpush1.msra.mxu0 0.0
        %1956 = vmatprep.subr.mxu0 0.0
        %1957 = vmatpush1.msra.mxu0 0.0
        %1958 = vmatprep.subr.mxu0 0.0
        %1959 = vmatpush1.msra.mxu0 0.0
        %1960 = vmatprep.subr.mxu0 0.0
        %1961 = vmatpush1.msra.mxu0 0.0
        %1962 = vmatprep.subr.mxu0 0.0
        %1963 = vmatpush1.msra.mxu0 0.0
        %1964 = vmatprep.subr.mxu0 0.0
        %1965 = vmatpush1.msra.mxu0 0.0
        %1966 = vmatprep.subr.mxu0 0.0
        %1967 = vmatpush1.msra.mxu0 0.0
        %1968 = vmatprep.mubr.f32.mxu0 0.0
        %1969 = vmatmul.mubr.f32.gmra.mrb[0].mxu0 %v1902
        %v1970 = vpop.f32.mrb[0].mxu0
        %v1971 = vadd.f32 %v1899, %v1970
        %v1972 = vpop.f32.mrb[0].mxu0
        %1973 = vdwg.mxu0
        %v1974 = vmul.f32 %v1971, 0.5
        %v1975 = vmul.f32 %v1971, 0.044715
        %v1976 = vmul.f32 %v1975, %v1971
        %v1977 = vmul.f32 %v1976, %v1971
        %v1978 = vadd.f32 %v1971, %v1977
        %v1979 = vmul.f32 %v1978, 0.7978846
        %v1980 = vtanh.pop %v1979
        %v1981 = vadd.f32 %v1980, 1.0
        %v1982 = vmul.f32 %v1974, %v1981
        %v1983 = vld [vmem:[%s14] sm:$0xff]
        %v1984 = vld [vmem:[%s14 + $0x8] sm:$0xff]
        %v1985 = vld [vmem:[%s14 + $0x10] sm:$0xff]
        %v1986 = vld [vmem:[%s14 + $0x18] sm:$0xff]
        %v1987 = vld [vmem:[%s14 + $0x20] sm:$0xff]
        %v1988 = vld [vmem:[%s14 + $0x28] sm:$0xff]
        %v1989 = vld [vmem:[%s14 + $0x30] sm:$0xff]
        %v1990 = vld [vmem:[%s14 + $0x38] sm:$0xff]
        %v1991 = vld [vmem:[#allocation10] sm:$0x1]
        %v1993 = vlaneseq
        %v1994 = vshrl.u32 %v1993, 7
        %v1995 = vsub.s32 0, %v1994
        %v1996 = vrot.slane %v1991, %v1995
        %vm1998 = vcmask 523264
        %v2000 = vsel %vm1998, %v1982, 0
        %2002 = vmatprep.subr.mxu0 0.0
        %2003 = vmatpush1.msra.mxu0 %v1983
        %2004 = vmatprep.subr.mxu0 0.0
        %2005 = vmatpush1.msra.mxu0 %v1984
        %2006 = vmatprep.subr.mxu0 0.0
        %2007 = vmatpush1.msra.mxu0 %v1985
        %2008 = vmatprep.subr.mxu0 0.0
        %2009 = vmatpush1.msra.mxu0 %v1986
        %2010 = vmatprep.subr.mxu0 0.0
        %2011 = vmatpush1.msra.mxu0 %v1987
        %2012 = vmatprep.subr.mxu0 0.0
        %2013 = vmatpush1.msra.mxu0 %v1988
        %2014 = vmatprep.subr.mxu0 0.0
        %2015 = vmatpush1.msra.mxu0 %v1989
        %2016 = vmatprep.subr.mxu0 0.0
        %2017 = vmatpush1.msra.mxu0 %v1990
        %2018 = vmatprep.subr.mxu0 0.0
        %2019 = vmatpush1.msra.mxu0 0.0
        %2020 = vmatprep.subr.mxu0 0.0
        %2021 = vmatpush1.msra.mxu0 0.0
        %2022 = vmatprep.subr.mxu0 0.0
        %2023 = vmatpush1.msra.mxu0 0.0
        %2024 = vmatprep.subr.mxu0 0.0
        %2025 = vmatpush1.msra.mxu0 0.0
        %2026 = vmatprep.subr.mxu0 0.0
        %2027 = vmatpush1.msra.mxu0 0.0
        %2028 = vmatprep.subr.mxu0 0.0
        %2029 = vmatpush1.msra.mxu0 0.0
        %2030 = vmatprep.subr.mxu0 0.0
        %2031 = vmatpush1.msra.mxu0 0.0
        %2032 = vmatprep.subr.mxu0 0.0
        %2033 = vmatpush1.msra.mxu0 0.0
        %2034 = vmatprep.subr.mxu0 0.0
        %2035 = vmatpush1.msra.mxu0 0.0
        %2036 = vmatprep.subr.mxu0 0.0
        %2037 = vmatpush1.msra.mxu0 0.0
        %2038 = vmatprep.subr.mxu0 0.0
        %2039 = vmatpush1.msra.mxu0 0.0
        %2040 = vmatprep.subr.mxu0 0.0
        %2041 = vmatpush1.msra.mxu0 0.0
        %2042 = vmatprep.subr.mxu0 0.0
        %2043 = vmatpush1.msra.mxu0 0.0
        %2044 = vmatprep.subr.mxu0 0.0
        %2045 = vmatpush1.msra.mxu0 0.0
        %2046 = vmatprep.subr.mxu0 0.0
        %2047 = vmatpush1.msra.mxu0 0.0
        %2048 = vmatprep.subr.mxu0 0.0
        %2049 = vmatpush1.msra.mxu0 0.0
        %2050 = vmatprep.subr.mxu0 0.0
        %2051 = vmatpush1.msra.mxu0 0.0
        %2052 = vmatprep.subr.mxu0 0.0
        %2053 = vmatpush1.msra.mxu0 0.0
        %2054 = vmatprep.subr.mxu0 0.0
        %2055 = vmatpush1.msra.mxu0 0.0
        %2056 = vmatprep.subr.mxu0 0.0
        %2057 = vmatpush1.msra.mxu0 0.0
        %2058 = vmatprep.subr.mxu0 0.0
        %2059 = vmatpush1.msra.mxu0 0.0
        %2060 = vmatprep.subr.mxu0 0.0
        %2061 = vmatpush1.msra.mxu0 0.0
        %2062 = vmatprep.subr.mxu0 0.0
        %2063 = vmatpush1.msra.mxu0 0.0
        %2064 = vmatprep.subr.mxu0 0.0
        %2065 = vmatpush1.msra.mxu0 0.0
        %2066 = vmatprep.mubr.f32.mxu0 0.0
        %2067 = vmatmul.mubr.f32.gmra.mrb[0].mxu0 %v2000
        %v2068 = vpop.f32.mrb[0].mxu0
        %v2069 = vadd.f32 %v1996, %v2068
        %v2070 = vpop.f32.mrb[0].mxu0
        %2071 = vdwg.mxu0
        %v2072 = vadd.f32 %v1860, %v2069
        %2073 = vst.msk [vmem:[%s590] sm:$0xff] %vm592, %v2072
        %s2074 = sand.u32 %s384, 1
        %s2075 = scalar_lea.sflag [#allocation4], %s2074
        %s2076 = sand.u32 %s384, 1
        %s2077 = smul.addr %s2076, 8
        %s2078 = scalar_lea.vmem [#allocation11], %s2077
        // Predicated region
        $region105: #{transformer_block.1} parent=83 // pred_check
          %p2079 = pneg %p394
        $region106: #{transformer_block.1} parent=83 // pred_check_branch
          %2081 = sbr.rel (%p2079) target = $region108
        $region107: #{transformer_block.1} parent=83 // pred_region
          %s2083 = ssub.s32 128, 128
          %2084 = vsyncadd %s2075, %s2083
          %s2085 = smul.addr %s35, 128
          %s2086 = scalar_lea.hbm %s16, %s2085
          %s2088 = sshll.u32 %s2078, 4
          %s2089 = int_to_ptr.vmem [resolvable:$true] %s2088
          %2091 = dma.vmem_to_hbm [thread:$0]  %s2089, 128, %s2086, %s2075
        $region108: #{transformer_block.1} parent=83 // pred_fallthru
          _
      $region84: #{transformer_block.1} parent=5 // pred_fallthru
        _
      %p2092 = scmp.le.s32.totalorder 2, %s30
      // Predicated region
      $region109: #{transformer_block.1} parent=5 // pred_check
        %p2093 = pneg %p2092
      $region110: #{transformer_block.1} parent=5 // pred_check_branch
        %2095 = sbr.rel (%p2093) target = $region112
      $region111: #{transformer_block.1} parent=5 // pred_region
        %s2096 = ssub.s32 %s30, 2
        // Predicated region
        $region113: #{transformer_block.1} parent=111 // pred_check
          %p2097 = pneg %p400
        $region114: #{transformer_block.1} parent=111 // pred_check_branch
          %2099 = sbr.rel (%p2097) target = $region116
        $region115: #{transformer_block.1} parent=111 // pred_region
          %s2100 = sand.u32 %s385, 1
          %s2101 = scalar_lea.sflag [#allocation4], %s2100
          %s2102 = sand.u32 %s385, 1
          %s2103 = smul.addr %s2102, 8
          %s2104 = scalar_lea.vmem [#allocation11], %s2103
          %2105 = dma.done %s2101, 128
        $region116: #{transformer_block.1} parent=111 // pred_fallthru
          _
      $region112: #{transformer_block.1} parent=5 // pred_fallthru
        _
    $region6: #{transformer_block.1} parent=1 // loop_footer
      %s34 = sadd.s32 1, %s30
    $region7: #{transformer_block.1} parent=1 // loop_footer_branch
      %29 = sbr.rel target = $region3
    $region8: #{transformer_block.1} parent=1 // loop_exit
      _
    %2106 = vsyncpa [#allocation3], 1
    %s2107 = scalar_lea.sflag [#allocation3], 1
    %2108 = vsyncpa %s2107, 1
    %2109 = vsyncpa [#allocation6], 1
    %2110 = vsyncpa [#allocation9], 1
    %2111 = vsyncpa [#allocation4], 1
    %s2112 = scalar_lea.sflag [#allocation4], 1
    %2113 = vsyncpa %s2112, 1

</llo_original>
